<compile_context>
chip_gen: v6e
topology: v6e:2x2x1
jax: 0.10.0
libtpu: 0.0.40
codegen_flags: <defaults>
</compile_context>

<pallas_src>
import functools

import jax
import jax.numpy as jnp
import numpy as np
from jax import lax
from jax.experimental import pallas as pl
from jax.experimental.pallas import tpu as pltpu

KERNEL_SIZES = (3, 4, 5)
KMAX = max(KERNEL_SIZES)
LANES = 128


def _round_up(x, m):
    return ((x + m - 1) // m) * m


def fused_textcnn_kernel(x_ref, w_ref, b_ref, lim_ref, o_ref, *, Nb, H, W,
                         Ctot_p):
    """Fused conv(3,4,5) + bias + tanh + global max-pool for one batch block.

    x_ref  : (Nb, H, W)        bf16
    w_ref  : (KMAX, W, Ctot_p) bf16  -- per-shift packed weights w3|w4|w5|0pad
    b_ref  : (1, Ctot_p)       f32   -- packed biases b3|b4|b5|0pad
    lim_ref: (1, Ctot_p)       i32   -- per-column valid-row count L_k
    o_ref  : (Nb, Ctot_p)      f32   -- pooled features, PyTorch concat order
    """
    x = x_ref[...].reshape(Nb * H, W)                    # fold batch into M
    # acc[i, c] = sum_dh x[i + dh] . w_packed[dh][:, c]
    # dh = 0 initializes the accumulator (no zero-fill + add).
    acc = jnp.dot(x, w_ref[0], preferred_element_type=jnp.float32)
    for dh in range(1, KMAX):                            # static, 4 iters
        part = jnp.dot(x, w_ref[dh], preferred_element_type=jnp.float32)
        # roll(part, -dh): aligned sublane rotate on the XLU slot; one roll
        # per shift (shared by all three convs via the packed channels).
        part = pltpu.roll(part, shift=Nb * H - dh, axis=0)
        acc = acc + part
    acc = acc.reshape(Nb, H, Ctot_p)

    # Mask rows >= L_k with small broadcastable operands (no full-size iota).
    row = lax.broadcasted_iota(jnp.int32, (Nb, H, 1), 1)
    lim = lim_ref[...].reshape(1, 1, Ctot_p)
    pooled = jnp.max(jnp.where(row < lim, acc, jnp.float32(-jnp.inf)), axis=1)

    # tanh is monotone & bias is a per-column constant -> hoisted past max.
    o_ref[...] = jnp.tanh(pooled + b_ref[...])


def prepare_params(torch_params, dtype=jnp.bfloat16):
    """PyTorch-layout conv params -> packed kernel layout.

    torch_params[k] = (weight (C, 1, k, W), bias (C,))
    returns {"C", "Ctot_p", "w": (KMAX, W, Ctot_p) bf16,
             "b": (1, Ctot_p) f32, "k_of_col": (1, Ctot_p) i32}.
    """
    C = torch_params[KERNEL_SIZES[0]][0].shape[0]
    W = torch_params[KERNEL_SIZES[0]][0].shape[3]
    Ctot = len(KERNEL_SIZES) * C
    Ctot_p = _round_up(Ctot, LANES)

    w_packed = np.zeros((KMAX, W, Ctot_p), np.float32)
    b_packed = np.zeros((1, Ctot_p), np.float32)
    k_of_col = np.ones((1, Ctot_p), np.int32)   # pad cols: zero weights, L=H
    for gi, k in enumerate(KERNEL_SIZES):
        w_t, b_t = torch_params[k]
        w = np.transpose(np.asarray(w_t)[:, 0, :, :], (1, 2, 0))   # (k, W, C)
        w_packed[:k, :, gi * C:(gi + 1) * C] = w
        b_packed[0, gi * C:(gi + 1) * C] = np.asarray(b_t)
        k_of_col[0, gi * C:(gi + 1) * C] = k
    return {
        "C": C,
        "Ctot_p": Ctot_p,
        "w": jnp.asarray(w_packed, dtype),
        "b": jnp.asarray(b_packed, jnp.float32),
        "k_of_col": jnp.asarray(k_of_col, jnp.int32),
    }


def textcnn_features(x, params, *, target_rows=512, max_rows=4096):
    """x: (N, H, W) -> (N, 3*C) fused conv + tanh + global-max-pool features."""
    N, H, W = x.shape
    C, Ctot_p = params["C"], params["Ctot_p"]

    # Adaptive batch block: aim for >= ~target_rows M-rows per grid step
    # (amortizes ~0.35us/step overhead at small H) while keeping the f32
    # accumulator comfortably inside scoped VMEM at large H.
    nb = max(1, min(pl.cdiv(target_rows, H), max(1, max_rows // H)))
    if N <= nb:
        Nb, N_pad = N, N                 # single block == full batch extent
    else:
        Nb = _round_up(nb, 8)            # tiled output block: 8-row aligned
        N_pad = _round_up(N, Nb)
    if N_pad != N:
        x = jnp.pad(x, ((0, N_pad - N), (0, 0), (0, 0)))
    x = x.astype(params["w"].dtype)

    # Per-column valid-row count L_k = H - k + 1 (pad columns: L = H).
    limit = (H + 1) - params["k_of_col"]                    # (1, Ctot_p) i32

    kernel = functools.partial(fused_textcnn_kernel,
                               Nb=Nb, H=H, W=W, Ctot_p=Ctot_p)

    # Rough VMEM estimate: double-buffered x/out, resident weights, and the
    # f32 acc/part/masked temporaries. Only raise the scoped limit when the
    # smallest default (v5e ~16 MiB) would be exceeded; cap well below v7x's
    # 64 MiB physical VMEM.
    est = (2 * Nb * H * W * 2 + 2 * Nb * Ctot_p * 4
           + 2 * (KMAX * W * Ctot_p * 2 + 2 * Ctot_p * 4 + 2 * Ctot_p * 4)
           + 3 * Nb * H * Ctot_p * 4)
    if est > (14 << 20):
        cparams = pltpu.CompilerParams(
            dimension_semantics=("parallel",),
            vmem_limit_bytes=min(est + (4 << 20), 48 << 20))
    else:
        cparams = pltpu.CompilerParams(dimension_semantics=("parallel",))

    feats = pl.pallas_call(
        kernel,
        out_shape=jax.ShapeDtypeStruct((N_pad, Ctot_p), jnp.float32),
        grid_spec=pltpu.PrefetchScalarGridSpec(
            num_scalar_prefetch=0,
            grid=(N_pad // Nb,),
            in_specs=[
                pl.BlockSpec((Nb, H, W), lambda n: (n, 0, 0)),
                pl.BlockSpec((KMAX, W, Ctot_p), lambda n: (0, 0, 0)),
                pl.BlockSpec((1, Ctot_p), lambda n: (0, 0)),
                pl.BlockSpec((1, Ctot_p), lambda n: (0, 0)),
            ],
            out_specs=pl.BlockSpec((Nb, Ctot_p), lambda n: (n, 0)),
        ),
        compiler_params=cparams,
    )(x, params["w"], params["b"], limit)

    # Channels were packed contiguously (w3|w4|w5|pad), so PyTorch's concat
    # order is already the output order: a single slice, no gather/concat.
    return feats[:N, :len(KERNEL_SIZES) * C]


def model_forward(x_nchw, params):
    """x_nchw: (N, 1, H, W) like PyTorch; returns (N, 3*C, 1)."""
    x = x_nchw[:, 0, :, :].astype(jnp.float32)          # (N, H, W)
    feats = textcnn_features(x, params)                 # (N, 3C)
    # TODO(synk): F.dropout(x) in the reference defaults to training=True
    # (stochastic); implemented as identity (inference semantics) here.
    # F.softmax with implicit dim resolves to dim=0 for the 3-D (N, 3C, 1)
    # tensor; the tiny softmax stays in plain JAX (no pallas_call overhead).
    out = jax.nn.softmax(feats, axis=0)
    return out[:, :, None]                              # (N, 3C, 1)


def ref_forward(x_nchw, torch_params):
    """Pure-JAX reference (unpadded f32 params) for correctness checking."""
    x = x_nchw[:, 0, :, :].astype(jnp.float32)
    feats = []
    for k in KERNEL_SIZES:
        w_t, b_t = torch_params[k]
        w = jnp.transpose(w_t[:, 0, :, :], (1, 2, 0))   # (k, W, C)
        L = x.shape[1] - k + 1
        patches = jnp.stack([x[:, i:i + k, :] for i in range(L)], axis=1)
        z = jnp.einsum("nlkw,kwc->nlc", patches, w) + b_t[None, None, :]
        feats.append(jnp.max(jnp.tanh(z), axis=1))
    xx = jnp.concatenate(feats, axis=1)
    return jax.nn.softmax(xx, axis=0)[:, :, None]


if __name__ == "__main__":
    # Small shapes consistent with the module structure (original uses
    # N=1, H=840, W=200, C=100): N batch, 1 input channel, H sequence
    # positions, W embedding dim == conv kernel width, C channels per conv.
    N, H, W, C = 4, 24, 128, 100

    key = jax.random.PRNGKey(0)
    kx, *wkeys = jax.random.split(key, 7)
    x = jax.random.normal(kx, (N, 1, H, W), jnp.float32)

    torch_params = {}
    for k, kw_, kb_ in zip(KERNEL_SIZES, wkeys[0::2], wkeys[1::2]):
        fan_in = 1 * k * W
        bound = 1.0 / (fan_in ** 0.5)
        # PyTorch conv weight layout (C, 1, k, W); bias (C,).
        w_t = jax.random.uniform(kw_, (C, 1, k, W), jnp.float32, -bound, bound)
        b_t = jax.random.uniform(kb_, (C,), jnp.float32, -bound, bound)
        torch_params[k] = (w_t, b_t)

    params = prepare_params(torch_params)

    out = jax.block_until_ready(model_forward(x, params))
    assert out.shape == (N, 3 * C, 1), out.shape

    ref = jax.block_until_ready(ref_forward(x, torch_params))
    assert jnp.allclose(out, ref, atol=2e-2, rtol=2e-2), float(
        jnp.max(jnp.abs(out - ref)))

    print("KERNEL_OK")
</pallas_src>

<mosaic_0001>
module attributes {stable_mosaic.version = 11 : i64} {
  func.func @fused_textcnn_kernel(%arg0: i32, %arg1: memref<4x24x128xbf16, #tpu.memory_space<vmem>>, %arg2: memref<5x128x384xbf16, #tpu.memory_space<vmem>>, %arg3: memref<1x384xf32, #tpu.memory_space<vmem>>, %arg4: memref<1x384xi32, #tpu.memory_space<vmem>>, %arg5: memref<4x384xf32, #tpu.memory_space<vmem>>) attributes {dimension_semantics = [#tpu.dimension_semantics<parallel>], iteration_bounds = array<i64: 1>, scalar_prefetch = 0 : i64, scratch_operands = 0 : i64, tpu.core_type = #tpu.core_type<tc>, window_params = [{transform_indices = @transform_0, window_bounds = array<i64: 4, 24, 128>}, {pipeline_mode = #tpu.pipeline_mode<synchronous>, transform_indices = @transform_1, window_bounds = array<i64: 5, 128, 384>}, {pipeline_mode = #tpu.pipeline_mode<synchronous>, transform_indices = @transform_2, window_bounds = array<i64: 1, 384>}, {pipeline_mode = #tpu.pipeline_mode<synchronous>, transform_indices = @transform_3, window_bounds = array<i64: 1, 384>}, {transform_indices = @transform_4, window_bounds = array<i64: 4, 384>}]} {
    %c0 = arith.constant 0 : index
    %c0_0 = arith.constant 0 : index
    %c0_1 = arith.constant 0 : index
    %0 = vector.load %arg1[%c0, %c0_0, %c0_1] : memref<4x24x128xbf16, #tpu.memory_space<vmem>>, vector<4x24x128xbf16>
    %1 = vector.shape_cast %0 : vector<4x24x128xbf16> to vector<96x128xbf16>
    %c0_2 = arith.constant 0 : index
    %c0_3 = arith.constant 0 : index
    %c0_4 = arith.constant 0 : index
    %2 = vector.load %arg2[%c0_2, %c0_3, %c0_4] : memref<5x128x384xbf16, #tpu.memory_space<vmem>>, vector<1x128x384xbf16>
    %3 = vector.shape_cast %2 : vector<1x128x384xbf16> to vector<128x384xbf16>
    %cst = arith.constant dense<0.000000e+00> : vector<96x384xf32>
    %4 = tpu.matmul %1, %3, %cst {dimension_numbers = #tpu.dot_dimension_numbers<[1], [0], [0], [1], [0, 0, 1, 1], [], []>} : vector<96x128xbf16>, vector<128x384xbf16>, vector<96x384xf32> -> vector<96x384xf32>
    %c1 = arith.constant 1 : index
    %c0_5 = arith.constant 0 : index
    %c0_6 = arith.constant 0 : index
    %5 = vector.load %arg2[%c1, %c0_5, %c0_6] : memref<5x128x384xbf16, #tpu.memory_space<vmem>>, vector<1x128x384xbf16>
    %6 = vector.shape_cast %5 : vector<1x128x384xbf16> to vector<128x384xbf16>
    %cst_7 = arith.constant dense<0.000000e+00> : vector<96x384xf32>
    %7 = tpu.matmul %1, %6, %cst_7 {dimension_numbers = #tpu.dot_dimension_numbers<[1], [0], [0], [1], [0, 0, 1, 1], [], []>} : vector<96x128xbf16>, vector<128x384xbf16>, vector<96x384xf32> -> vector<96x384xf32>
    %c95_i32 = arith.constant 95 : i32
    %8 = tpu.dynamic_rotate %7 by %c95_i32 dim 0 : vector<96x384xf32>, i32 -> vector<96x384xf32>
    %9 = arith.addf %4, %8 : vector<96x384xf32>
    %c2 = arith.constant 2 : index
    %c0_8 = arith.constant 0 : index
    %c0_9 = arith.constant 0 : index
    %10 = vector.load %arg2[%c2, %c0_8, %c0_9] : memref<5x128x384xbf16, #tpu.memory_space<vmem>>, vector<1x128x384xbf16>
    %11 = vector.shape_cast %10 : vector<1x128x384xbf16> to vector<128x384xbf16>
    %cst_10 = arith.constant dense<0.000000e+00> : vector<96x384xf32>
    %12 = tpu.matmul %1, %11, %cst_10 {dimension_numbers = #tpu.dot_dimension_numbers<[1], [0], [0], [1], [0, 0, 1, 1], [], []>} : vector<96x128xbf16>, vector<128x384xbf16>, vector<96x384xf32> -> vector<96x384xf32>
    %c94_i32 = arith.constant 94 : i32
    %13 = tpu.dynamic_rotate %12 by %c94_i32 dim 0 : vector<96x384xf32>, i32 -> vector<96x384xf32>
    %14 = arith.addf %9, %13 : vector<96x384xf32>
    %c3 = arith.constant 3 : index
    %c0_11 = arith.constant 0 : index
    %c0_12 = arith.constant 0 : index
    %15 = vector.load %arg2[%c3, %c0_11, %c0_12] : memref<5x128x384xbf16, #tpu.memory_space<vmem>>, vector<1x128x384xbf16>
    %16 = vector.shape_cast %15 : vector<1x128x384xbf16> to vector<128x384xbf16>
    %cst_13 = arith.constant dense<0.000000e+00> : vector<96x384xf32>
    %17 = tpu.matmul %1, %16, %cst_13 {dimension_numbers = #tpu.dot_dimension_numbers<[1], [0], [0], [1], [0, 0, 1, 1], [], []>} : vector<96x128xbf16>, vector<128x384xbf16>, vector<96x384xf32> -> vector<96x384xf32>
    %c93_i32 = arith.constant 93 : i32
    %18 = tpu.dynamic_rotate %17 by %c93_i32 dim 0 : vector<96x384xf32>, i32 -> vector<96x384xf32>
    %19 = arith.addf %14, %18 : vector<96x384xf32>
    %c4 = arith.constant 4 : index
    %c0_14 = arith.constant 0 : index
    %c0_15 = arith.constant 0 : index
    %20 = vector.load %arg2[%c4, %c0_14, %c0_15] : memref<5x128x384xbf16, #tpu.memory_space<vmem>>, vector<1x128x384xbf16>
    %21 = vector.shape_cast %20 : vector<1x128x384xbf16> to vector<128x384xbf16>
    %cst_16 = arith.constant dense<0.000000e+00> : vector<96x384xf32>
    %22 = tpu.matmul %1, %21, %cst_16 {dimension_numbers = #tpu.dot_dimension_numbers<[1], [0], [0], [1], [0, 0, 1, 1], [], []>} : vector<96x128xbf16>, vector<128x384xbf16>, vector<96x384xf32> -> vector<96x384xf32>
    %c92_i32 = arith.constant 92 : i32
    %23 = tpu.dynamic_rotate %22 by %c92_i32 dim 0 : vector<96x384xf32>, i32 -> vector<96x384xf32>
    %24 = arith.addf %19, %23 : vector<96x384xf32>
    %25 = vector.shape_cast %24 : vector<96x384xf32> to vector<4x24x384xf32>
    %26 = tpu.iota {dimensions = array<i32: 1>} : vector<4x24x1xi32>
    %c0_17 = arith.constant 0 : index
    %c0_18 = arith.constant 0 : index
    %27 = vector.load %arg4[%c0_17, %c0_18] : memref<1x384xi32, #tpu.memory_space<vmem>>, vector<1x384xi32>
    %28 = vector.shape_cast %27 : vector<1x384xi32> to vector<1x1x384xi32>
    %29 = vector.broadcast %26 : vector<4x24x1xi32> to vector<4x24x384xi32>
    %30 = vector.broadcast %28 : vector<1x1x384xi32> to vector<4x24x384xi32>
    %31 = arith.cmpi slt, %29, %30 : vector<4x24x384xi32>
    %cst_19 = arith.constant 0xFF800000 : f32
    %32 = vector.broadcast %cst_19 : f32 to vector<4x24x384xf32>
    %33 = arith.select %31, %25, %32 : vector<4x24x384xi1>, vector<4x24x384xf32>
    %cst_20 = arith.constant dense<0xFF800000> : vector<4x384xf32>
    %34 = vector.multi_reduction <maximumf>, %33, %cst_20 [1] : vector<4x24x384xf32> to vector<4x384xf32>
    %c0_21 = arith.constant 0 : index
    %c0_22 = arith.constant 0 : index
    %35 = vector.load %arg3[%c0_21, %c0_22] : memref<1x384xf32, #tpu.memory_space<vmem>>, vector<1x384xf32>
    %36 = vector.broadcast %35 : vector<1x384xf32> to vector<4x384xf32>
    %37 = arith.addf %34, %36 : vector<4x384xf32>
    %38 = math.tanh %37 : vector<4x384xf32>
    %c0_23 = arith.constant 0 : index
    %c0_24 = arith.constant 0 : index
    %39 = vector.load %arg5[%c0_23, %c0_24] : memref<4x384xf32, #tpu.memory_space<vmem>>, vector<4x384xf32>
    tpu.vector_store %arg5[%c0_23, %c0_24], %38 {strides = array<i32>} : memref<4x384xf32, #tpu.memory_space<vmem>>, vector<4x384xf32>,
    return
  }
  func.func @transform_0(%arg0: i32) -> (i32, i32, i32) {
    %c0_i32 = arith.constant 0 : i32
    %c0_i32_0 = arith.constant 0 : i32
    %c0_i32_1 = arith.constant 0 : i32
    return %arg0, %c0_i32, %c0_i32_0 : i32, i32, i32
  }
  func.func @transform_1(%arg0: i32) -> (i32, i32, i32) {
    %c0_i32 = arith.constant 0 : i32
    %c0_i32_0 = arith.constant 0 : i32
    %c0_i32_1 = arith.constant 0 : i32
    %c0_i32_2 = arith.constant 0 : i32
    return %c0_i32, %c0_i32_0, %c0_i32_1 : i32, i32, i32
  }
  func.func @transform_2(%arg0: i32) -> (i32, i32) {
    %c0_i32 = arith.constant 0 : i32
    %c0_i32_0 = arith.constant 0 : i32
    %c0_i32_1 = arith.constant 0 : i32
    return %c0_i32, %c0_i32_0 : i32, i32
  }
  func.func @transform_3(%arg0: i32) -> (i32, i32) {
    %c0_i32 = arith.constant 0 : i32
    %c0_i32_0 = arith.constant 0 : i32
    %c0_i32_1 = arith.constant 0 : i32
    return %c0_i32, %c0_i32_0 : i32, i32
  }
  func.func @transform_4(%arg0: i32) -> (i32, i32) {
    %c0_i32 = arith.constant 0 : i32
    %c0_i32_0 = arith.constant 0 : i32
    return %arg0, %c0_i32 : i32, i32
  }
}

</mosaic_0001>

<llo_original>
// kernel: tpu_custom_call.1
$region0: #{tpu_custom_call.1}
  #allocation0 [shape = 'u32[]', space=smem, size = 0x4, offset = 0x4, fixed_abs, tag = 'smem constant byte address 0x4 - core index']
  #allocation1 [shape = 'u32[144,128]{1,0:T(1,128)}', space=vmem, size = 0x12000, scoped, tag = 'internal scratch']
  %s0 = inlined_call_operand.hbm [shape: bf16[4,24,128], index: 0, kind: input, shape index: {}]
  %s1 = inlined_call_operand.hbm [shape: bf16[5,128,384], index: 1, kind: input, shape index: {}]
  %s2 = inlined_call_operand.vmem [shape: f32[1,384], index: 2, kind: input, shape index: {}]
  %s3 = inlined_call_operand.hbm [shape: s32[1,384], index: 3, kind: input, shape index: {}]
  %s4 = inlined_call_operand.hbm [shape: f32[4,384], index: 4, kind: output, shape index: {}]
  %s5 = sld [smem:[#allocation0]]
  $region38: #{tpu_custom_call.1} parent=0
    _
  %s7 = ssub.s32 1, %s5
  %s8 = scalar_select 0, %s7, %s5
  $region1: #{tpu_custom_call.1} parent=0
    #allocation2 [shape = 'u8[24576]{0}', space=vmem, size = 0x6000, scoped, tag = 'input window, operand 0, single buffered']
    #allocation3 [shape = 's32[1]{0}', space=sflag, size = 0x4, scoped, tag = 'scoped memory for tpu_custom_call.1']
    #allocation4 [shape = 's32[1]{0}', space=sflag, size = 0x4, scoped, tag = 'scoped memory for tpu_custom_call.1']
    #allocation5 [shape = 'u8[491520]{0}', space=vmem, size = 0x78000, scoped, tag = 'input window, operand 1, single buffered']
    #allocation6 [shape = 's32[1]{0}', space=sflag, size = 0x4, scoped, tag = 'scoped memory for tpu_custom_call.1']
    #allocation7 [shape = 'u8[1536]{0}', space=vmem, size = 0x800, scoped, tag = 'input window, operand 3, single buffered']
    #allocation8 [shape = 'u8[6144]{0}', space=vmem, size = 0x1800, scoped, tag = 'output window, operand 0, single buffered']
    %9 = vsyncpa [#allocation3], 0
    %10 = vsyncpa [#allocation6], 0
    %11 = vsyncpa [#allocation4], 0
    // Predicated region
    $region2: #{tpu_custom_call.1} parent=1 // pred_check
      _
    $region3: #{tpu_custom_call.1} parent=1 // pred_check_branch
      %13 = sbr.rel (0) target = $region5
    $region4: #{tpu_custom_call.1} parent=1 // pred_region
      %s15 = ssub.s32 768, 768
      %16 = vsyncadd [#allocation3], %s15
      %s17 = sshll.u32 [#allocation2], 4
      %s18 = int_to_ptr.vmem [resolvable:$true] %s17
      %23 = dma.hbm_to_vmem [thread:$0]  %s0, 768, %s18, [#allocation3], 64, 64, 4
    $region5: #{tpu_custom_call.1} parent=1 // pred_fallthru
      _
    // Predicated region
    $region6: #{tpu_custom_call.1} parent=1 // pred_check
      _
    $region7: #{tpu_custom_call.1} parent=1 // pred_check_branch
      %25 = sbr.rel (0) target = $region9
    $region8: #{tpu_custom_call.1} parent=1 // pred_region
      %s27 = ssub.s32 15360, 15360
      %28 = vsyncadd [#allocation6], %s27
      %s29 = sshll.u32 [#allocation5], 4
      %s30 = int_to_ptr.vmem [resolvable:$true] %s29
      %35 = dma.hbm_to_vmem [thread:$0]  %s1, 15360, %s30, [#allocation6], 192, 192, 12
    $region9: #{tpu_custom_call.1} parent=1 // pred_fallthru
      _
    // Predicated region
    $region10: #{tpu_custom_call.1} parent=1 // pred_check
      _
    $region11: #{tpu_custom_call.1} parent=1 // pred_check_branch
      %37 = sbr.rel (0) target = $region13
    $region12: #{tpu_custom_call.1} parent=1 // pred_region
      _
    $region13: #{tpu_custom_call.1} parent=1 // pred_fallthru
      _
    // Predicated region
    $region14: #{tpu_custom_call.1} parent=1 // pred_check
      _
    $region15: #{tpu_custom_call.1} parent=1 // pred_check_branch
      %39 = sbr.rel (0) target = $region17
    $region16: #{tpu_custom_call.1} parent=1 // pred_region
      %s41 = ssub.s32 48, 48
      %42 = vsyncadd [#allocation6], %s41
      %s44 = sshll.u32 [#allocation7], 4
      %s45 = int_to_ptr.vmem [resolvable:$true] %s44
      %47 = dma.hbm_to_vmem [thread:$0]  %s3, 48, %s45, [#allocation6]
    $region17: #{tpu_custom_call.1} parent=1 // pred_fallthru
      _
    // Predicated region
    $region18: #{tpu_custom_call.1} parent=1 // pred_check
      _
    $region19: #{tpu_custom_call.1} parent=1 // pred_check_branch
      %49 = sbr.rel (0) target = $region21
    $region20: #{tpu_custom_call.1} parent=1 // pred_region
      %50 = dma.done [#allocation3], 768
    $region21: #{tpu_custom_call.1} parent=1 // pred_fallthru
      _
    // Predicated region
    $region22: #{tpu_custom_call.1} parent=1 // pred_check
      _
    $region23: #{tpu_custom_call.1} parent=1 // pred_check_branch
      %52 = sbr.rel (0) target = $region25
    $region24: #{tpu_custom_call.1} parent=1 // pred_region
      %53 = dma.done [#allocation6], 15360
    $region25: #{tpu_custom_call.1} parent=1 // pred_fallthru
      _
    // Predicated region
    $region26: #{tpu_custom_call.1} parent=1 // pred_check
      _
    $region27: #{tpu_custom_call.1} parent=1 // pred_check_branch
      %55 = sbr.rel (0) target = $region29
    $region28: #{tpu_custom_call.1} parent=1 // pred_region
      %56 = dma.done [#allocation6], 48
    $region29: #{tpu_custom_call.1} parent=1 // pred_fallthru
      _
    %v58 = vld [vmem:[#allocation2] sm:$0xf]
    %v59 = vld [vmem:[#allocation2 + $0x4] sm:$0xf]
    %v60 = vld [vmem:[#allocation2 + $0x8] sm:$0xf]
    %v61 = vld [vmem:[#allocation2 + $0xc] sm:$0xf]
    %v62 = vld [vmem:[#allocation2 + $0x10] sm:$0xf]
    %v63 = vld [vmem:[#allocation2 + $0x14] sm:$0xf]
    %v64 = vld [vmem:[#allocation2 + $0x18] sm:$0xf]
    %v65 = vld [vmem:[#allocation2 + $0x1c] sm:$0xf]
    %v66 = vld [vmem:[#allocation2 + $0x20] sm:$0xf]
    %v67 = vld [vmem:[#allocation2 + $0x24] sm:$0xf]
    %v68 = vld [vmem:[#allocation2 + $0x28] sm:$0xf]
    %v69 = vld [vmem:[#allocation2 + $0x2c] sm:$0xf]
    %v70 = vld [vmem:[#allocation5] sm:$0xff]
    %v71 = vld [vmem:[#allocation5 + $0x8] sm:$0xf]
    %v72 = vld [vmem:[#allocation5 + $0xc] sm:$0xff]
    %v73 = vld [vmem:[#allocation5 + $0x14] sm:$0xf]
    %v74 = vld [vmem:[#allocation5 + $0x18] sm:$0xff]
    %v75 = vld [vmem:[#allocation5 + $0x20] sm:$0xf]
    %v76 = vld [vmem:[#allocation5 + $0x24] sm:$0xff]
    %v77 = vld [vmem:[#allocation5 + $0x2c] sm:$0xf]
    %v78 = vld [vmem:[#allocation5 + $0x30] sm:$0xff]
    %v79 = vld [vmem:[#allocation5 + $0x38] sm:$0xf]
    %v80 = vld [vmem:[#allocation5 + $0x3c] sm:$0xff]
    %v81 = vld [vmem:[#allocation5 + $0x44] sm:$0xf]
    %v82 = vld [vmem:[#allocation5 + $0x48] sm:$0xff]
    %v83 = vld [vmem:[#allocation5 + $0x50] sm:$0xf]
    %v84 = vld [vmem:[#allocation5 + $0x54] sm:$0xff]
    %v85 = vld [vmem:[#allocation5 + $0x5c] sm:$0xf]
    %v86 = vld [vmem:[#allocation5 + $0x60] sm:$0xff]
    %v87 = vld [vmem:[#allocation5 + $0x68] sm:$0xf]
    %v88 = vld [vmem:[#allocation5 + $0x6c] sm:$0xff]
    %v89 = vld [vmem:[#allocation5 + $0x74] sm:$0xf]
    %v90 = vld [vmem:[#allocation5 + $0x78] sm:$0xff]
    %v91 = vld [vmem:[#allocation5 + $0x80] sm:$0xf]
    %v92 = vld [vmem:[#allocation5 + $0x84] sm:$0xff]
    %v93 = vld [vmem:[#allocation5 + $0x8c] sm:$0xf]
    %v94 = vld [vmem:[#allocation5 + $0x90] sm:$0xff]
    %v95 = vld [vmem:[#allocation5 + $0x98] sm:$0xf]
    %v96 = vld [vmem:[#allocation5 + $0x9c] sm:$0xff]
    %v97 = vld [vmem:[#allocation5 + $0xa4] sm:$0xf]
    %v98 = vld [vmem:[#allocation5 + $0xa8] sm:$0xff]
    %v99 = vld [vmem:[#allocation5 + $0xb0] sm:$0xf]
    %v100 = vld [vmem:[#allocation5 + $0xb4] sm:$0xff]
    %v101 = vld [vmem:[#allocation5 + $0xbc] sm:$0xf]
    %s102 = scalar_lea.vmem [#allocation5], 192
    %v103 = vld [vmem:[%s102] sm:$0xff]
    %v104 = vld [vmem:[%s102 + $0x8] sm:$0xf]
    %v105 = vld [vmem:[%s102 + $0xc] sm:$0xff]
    %v106 = vld [vmem:[%s102 + $0x14] sm:$0xf]
    %v107 = vld [vmem:[%s102 + $0x18] sm:$0xff]
    %v108 = vld [vmem:[%s102 + $0x20] sm:$0xf]
    %v109 = vld [vmem:[%s102 + $0x24] sm:$0xff]
    %v110 = vld [vmem:[%s102 + $0x2c] sm:$0xf]
    %v111 = vld [vmem:[%s102 + $0x30] sm:$0xff]
    %v112 = vld [vmem:[%s102 + $0x38] sm:$0xf]
    %v113 = vld [vmem:[%s102 + $0x3c] sm:$0xff]
    %v114 = vld [vmem:[%s102 + $0x44] sm:$0xf]
    %v115 = vld [vmem:[%s102 + $0x48] sm:$0xff]
    %v116 = vld [vmem:[%s102 + $0x50] sm:$0xf]
    %v117 = vld [vmem:[%s102 + $0x54] sm:$0xff]
    %v118 = vld [vmem:[%s102 + $0x5c] sm:$0xf]
    %v119 = vld [vmem:[%s102 + $0x60] sm:$0xff]
    %v120 = vld [vmem:[%s102 + $0x68] sm:$0xf]
    %v121 = vld [vmem:[%s102 + $0x6c] sm:$0xff]
    %v122 = vld [vmem:[%s102 + $0x74] sm:$0xf]
    %v123 = vld [vmem:[%s102 + $0x78] sm:$0xff]
    %v124 = vld [vmem:[%s102 + $0x80] sm:$0xf]
    %v125 = vld [vmem:[%s102 + $0x84] sm:$0xff]
    %v126 = vld [vmem:[%s102 + $0x8c] sm:$0xf]
    %v127 = vld [vmem:[%s102 + $0x90] sm:$0xff]
    %v128 = vld [vmem:[%s102 + $0x98] sm:$0xf]
    %v129 = vld [vmem:[%s102 + $0x9c] sm:$0xff]
    %v130 = vld [vmem:[%s102 + $0xa4] sm:$0xf]
    %v131 = vld [vmem:[%s102 + $0xa8] sm:$0xff]
    %v132 = vld [vmem:[%s102 + $0xb0] sm:$0xf]
    %v133 = vld [vmem:[%s102 + $0xb4] sm:$0xff]
    %v134 = vld [vmem:[%s102 + $0xbc] sm:$0xf]
    %v147 = vunpack.c.l.b16 %v58
    %v148 = vunpack.c.l.b16 %v59
    %v149 = vunpack.c.l.b16 %v60
    %v150 = vunpack.c.l.b16 %v61
    %v151 = vunpack.c.l.b16 %v62
    %v152 = vunpack.c.l.b16 %v63
    %v153 = vunpack.c.l.b16 %v64
    %v154 = vunpack.c.l.b16 %v65
    %v155 = vunpack.c.l.b16 %v66
    %v156 = vunpack.c.l.b16 %v67
    %v157 = vunpack.c.l.b16 %v68
    %v158 = vunpack.c.l.b16 %v69
    %v159 = vpack.c.b16 %v148, %v147
    %v160 = vpack.c.b16 %v150, %v149
    %v161 = vpack.c.b16 %v152, %v151
    %v162 = vpack.c.b16 %v154, %v153
    %v163 = vpack.c.b16 %v156, %v155
    %v164 = vpack.c.b16 %v158, %v157
    %v203 = vunpack.c.l.b16 %v103
    %v204 = vunpack.c.h.b16 %v103
    %v205 = vunpack.c.l.b16 %v104
    %v206 = vunpack.c.l.b16 %v105
    %v207 = vunpack.c.h.b16 %v105
    %v208 = vunpack.c.l.b16 %v106
    %v209 = vunpack.c.l.b16 %v107
    %v210 = vunpack.c.h.b16 %v107
    %v211 = vunpack.c.l.b16 %v108
    %v212 = vunpack.c.l.b16 %v109
    %v213 = vunpack.c.h.b16 %v109
    %v214 = vunpack.c.l.b16 %v110
    %v215 = vunpack.c.l.b16 %v111
    %v216 = vunpack.c.h.b16 %v111
    %v217 = vunpack.c.l.b16 %v112
    %v218 = vunpack.c.l.b16 %v113
    %v219 = vunpack.c.h.b16 %v113
    %v220 = vunpack.c.l.b16 %v114
    %v221 = vunpack.c.l.b16 %v115
    %v222 = vunpack.c.h.b16 %v115
    %v223 = vunpack.c.l.b16 %v116
    %v224 = vunpack.c.l.b16 %v117
    %v225 = vunpack.c.h.b16 %v117
    %v226 = vunpack.c.l.b16 %v118
    %v227 = vunpack.c.l.b16 %v119
    %v228 = vunpack.c.h.b16 %v119
    %v229 = vunpack.c.l.b16 %v120
    %v230 = vunpack.c.l.b16 %v121
    %v231 = vunpack.c.h.b16 %v121
    %v232 = vunpack.c.l.b16 %v122
    %v233 = vunpack.c.l.b16 %v123
    %v234 = vunpack.c.h.b16 %v123
    %v235 = vunpack.c.l.b16 %v124
    %v236 = vunpack.c.l.b16 %v125
    %v237 = vunpack.c.h.b16 %v125
    %v238 = vunpack.c.l.b16 %v126
    %v239 = vunpack.c.l.b16 %v127
    %v240 = vunpack.c.h.b16 %v127
    %v241 = vunpack.c.l.b16 %v128
    %v242 = vunpack.c.l.b16 %v129
    %v243 = vunpack.c.h.b16 %v129
    %v244 = vunpack.c.l.b16 %v130
    %v245 = vunpack.c.l.b16 %v131
    %v246 = vunpack.c.h.b16 %v131
    %v247 = vunpack.c.l.b16 %v132
    %v248 = vunpack.c.l.b16 %v133
    %v249 = vunpack.c.h.b16 %v133
    %v250 = vunpack.c.l.b16 %v134
    %v251 = vpack.c.b16 %v206, %v203
    %v252 = vpack.c.b16 %v207, %v204
    %v253 = vpack.c.b16 %v208, %v205
    %v254 = vpack.c.b16 %v212, %v209
    %v255 = vpack.c.b16 %v213, %v210
    %v256 = vpack.c.b16 %v214, %v211
    %v257 = vpack.c.b16 %v218, %v215
    %v258 = vpack.c.b16 %v219, %v216
    %v259 = vpack.c.b16 %v220, %v217
    %v260 = vpack.c.b16 %v224, %v221
    %v261 = vpack.c.b16 %v225, %v222
    %v262 = vpack.c.b16 %v226, %v223
    %v263 = vpack.c.b16 %v230, %v227
    %v264 = vpack.c.b16 %v231, %v228
    %v265 = vpack.c.b16 %v232, %v229
    %v266 = vpack.c.b16 %v236, %v233
    %v267 = vpack.c.b16 %v237, %v234
    %v268 = vpack.c.b16 %v238, %v235
    %v269 = vpack.c.b16 %v242, %v239
    %v270 = vpack.c.b16 %v243, %v240
    %v271 = vpack.c.b16 %v244, %v241
    %v272 = vpack.c.b16 %v248, %v245
    %v273 = vpack.c.b16 %v249, %v246
    %v274 = vpack.c.b16 %v250, %v247
    %299 = vmatprep.subr.bf16.mxu0 %v273
    %300 = vmatpush1.bf16.msra.mxu0 %v272
    %301 = vmatprep.subr.bf16.mxu0 %v270
    %302 = vmatpush1.bf16.msra.mxu0 %v269
    %303 = vmatprep.subr.bf16.mxu0 %v267
    %304 = vmatpush1.bf16.msra.mxu0 %v266
    %305 = vmatprep.subr.bf16.mxu0 %v264
    %306 = vmatpush1.bf16.msra.mxu0 %v263
    %307 = vmatprep.subr.bf16.mxu0 %v261
    %308 = vmatpush1.bf16.msra.mxu0 %v260
    %309 = vmatprep.subr.bf16.mxu0 %v258
    %310 = vmatpush1.bf16.msra.mxu0 %v257
    %311 = vmatprep.subr.bf16.mxu0 %v255
    %312 = vmatpush1.bf16.msra.mxu0 %v254
    %313 = vmatprep.subr.bf16.mxu0 %v252
    %314 = vmatpush1.bf16.msra.mxu0 %v251
    %315 = vmatprep.subr.bf16.mxu0 0
    %316 = vmatpush2.bf16.msra.mxu0 0
    %317 = vmatprep.subr.bf16.mxu0 0
    %318 = vmatpush2.bf16.msra.mxu0 0
    %319 = vmatprep.subr.bf16.mxu0 0
    %320 = vmatpush2.bf16.msra.mxu0 0
    %321 = vmatprep.subr.bf16.mxu0 0
    %322 = vmatpush2.bf16.msra.mxu0 0
    %323 = vmatprep.subr.bf16.mxu0 0
    %324 = vmatpush2.bf16.msra.mxu0 0
    %325 = vmatprep.subr.bf16.mxu0 0
    %326 = vmatpush2.bf16.msra.mxu0 0
    %327 = vmatprep.subr.bf16.mxu0 0
    %328 = vmatpush2.bf16.msra.mxu0 0
    %329 = vmatprep.subr.bf16.mxu0 0
    %330 = vmatpush2.bf16.msra.mxu0 0
    %331 = vmatprep.mubr.bf16.mxu0 0
    %332 = vmatmul.mubr.bf16.gmra.mxu0 %v159
    %v333 = vpop.f32.mrf.mxu0
    %v334 = vadd.f32 0.0, %v333
    %v335 = vpop.f32.mrf.mxu0
    %v336 = vadd.f32 0.0, %v335
    %v337 = vpop.f32.mrf.mxu0
    %v338 = vadd.f32 0.0, %v337
    %v339 = vpop.f32.mrf.mxu0
    %v340 = vadd.f32 0.0, %v339
    %341 = vmatprep.mubr.bf16.mxu0 0
    %342 = vmatmul.mubr.bf16.gmra.mxu0 %v160
    %v343 = vpop.f32.mrf.mxu0
    %v344 = vadd.f32 0.0, %v343
    %v345 = vpop.f32.mrf.mxu0
    %v346 = vadd.f32 0.0, %v345
    %v347 = vpop.f32.mrf.mxu0
    %v348 = vadd.f32 0.0, %v347
    %v349 = vpop.f32.mrf.mxu0
    %v350 = vadd.f32 0.0, %v349
    %351 = vmatprep.mubr.bf16.mxu0 0
    %352 = vmatmul.mubr.bf16.gmra.mxu0 %v161
    %v353 = vpop.f32.mrf.mxu0
    %v354 = vadd.f32 0.0, %v353
    %v355 = vpop.f32.mrf.mxu0
    %v356 = vadd.f32 0.0, %v355
    %v357 = vpop.f32.mrf.mxu0
    %v358 = vadd.f32 0.0, %v357
    %v359 = vpop.f32.mrf.mxu0
    %v360 = vadd.f32 0.0, %v359
    %361 = vmatprep.mubr.bf16.mxu0 0
    %362 = vmatmul.mubr.bf16.gmra.mxu0 %v162
    %v363 = vpop.f32.mrf.mxu0
    %v364 = vadd.f32 0.0, %v363
    %v365 = vpop.f32.mrf.mxu0
    %v366 = vadd.f32 0.0, %v365
    %v367 = vpop.f32.mrf.mxu0
    %v368 = vadd.f32 0.0, %v367
    %v369 = vpop.f32.mrf.mxu0
    %v370 = vadd.f32 0.0, %v369
    %371 = vmatprep.mubr.bf16.mxu0 0
    %372 = vmatmul.mubr.bf16.gmra.mxu0 %v163
    %v373 = vpop.f32.mrf.mxu0
    %v374 = vadd.f32 0.0, %v373
    %v375 = vpop.f32.mrf.mxu0
    %v376 = vadd.f32 0.0, %v375
    %v377 = vpop.f32.mrf.mxu0
    %v378 = vadd.f32 0.0, %v377
    %v379 = vpop.f32.mrf.mxu0
    %v380 = vadd.f32 0.0, %v379
    %381 = vmatprep.mubr.bf16.mxu0 0
    %382 = vmatmul.mubr.bf16.gmra.mxu0 %v164
    %v383 = vpop.f32.mrf.mxu0
    %v384 = vadd.f32 0.0, %v383
    %v385 = vpop.f32.mrf.mxu0
    %v386 = vadd.f32 0.0, %v385
    %v387 = vpop.f32.mrf.mxu0
    %v388 = vadd.f32 0.0, %v387
    %v389 = vpop.f32.mrf.mxu0
    %v390 = vadd.f32 0.0, %v389
    %391 = vdwg.mxu0
    %392 = vmatprep.subr.bf16.mxu0 0
    %393 = vmatpush1.bf16.msra.mxu0 %v274
    %394 = vmatprep.subr.bf16.mxu0 0
    %395 = vmatpush1.bf16.msra.mxu0 %v271
    %396 = vmatprep.subr.bf16.mxu0 0
    %397 = vmatpush1.bf16.msra.mxu0 %v268
    %398 = vmatprep.subr.bf16.mxu0 0
    %399 = vmatpush1.bf16.msra.mxu0 %v265
    %400 = vmatprep.subr.bf16.mxu0 0
    %401 = vmatpush1.bf16.msra.mxu0 %v262
    %402 = vmatprep.subr.bf16.mxu0 0
    %403 = vmatpush1.bf16.msra.mxu0 %v259
    %404 = vmatprep.subr.bf16.mxu0 0
    %405 = vmatpush1.bf16.msra.mxu0 %v256
    %406 = vmatprep.subr.bf16.mxu0 0
    %407 = vmatpush1.bf16.msra.mxu0 %v253
    %408 = vmatprep.subr.bf16.mxu0 0
    %409 = vmatpush2.bf16.msra.mxu0 0
    %410 = vmatprep.subr.bf16.mxu0 0
    %411 = vmatpush2.bf16.msra.mxu0 0
    %412 = vmatprep.subr.bf16.mxu0 0
    %413 = vmatpush2.bf16.msra.mxu0 0
    %414 = vmatprep.subr.bf16.mxu0 0
    %415 = vmatpush2.bf16.msra.mxu0 0
    %416 = vmatprep.subr.bf16.mxu0 0
    %417 = vmatpush2.bf16.msra.mxu0 0
    %418 = vmatprep.subr.bf16.mxu0 0
    %419 = vmatpush2.bf16.msra.mxu0 0
    %420 = vmatprep.subr.bf16.mxu0 0
    %421 = vmatpush2.bf16.msra.mxu0 0
    %422 = vmatprep.subr.bf16.mxu0 0
    %423 = vmatpush2.bf16.msra.mxu0 0
    %424 = vmatprep.mubr.bf16.mxu0 0
    %425 = vmatmul.mubr.bf16.gmra.mxu0 %v159
    %v426 = vpop.f32.mrf.mxu0
    %v427 = vadd.f32 0.0, %v426
    %v428 = vpop.f32.mrf.mxu0
    %v429 = vpop.f32.mrf.mxu0
    %v430 = vadd.f32 0.0, %v429
    %v431 = vpop.f32.mrf.mxu0
    %432 = vmatprep.mubr.bf16.mxu0 0
    %433 = vmatmul.mubr.bf16.gmra.mxu0 %v160
    %v434 = vpop.f32.mrf.mxu0
    %v435 = vadd.f32 0.0, %v434
    %v436 = vpop.f32.mrf.mxu0
    %v437 = vpop.f32.mrf.mxu0
    %v438 = vadd.f32 0.0, %v437
    %v439 = vpop.f32.mrf.mxu0
    %440 = vmatprep.mubr.bf16.mxu0 0
    %441 = vmatmul.mubr.bf16.gmra.mxu0 %v161
    %v442 = vpop.f32.mrf.mxu0
    %v443 = vadd.f32 0.0, %v442
    %v444 = vpop.f32.mrf.mxu0
    %v445 = vpop.f32.mrf.mxu0
    %v446 = vadd.f32 0.0, %v445
    %v447 = vpop.f32.mrf.mxu0
    %448 = vmatprep.mubr.bf16.mxu0 0
    %449 = vmatmul.mubr.bf16.gmra.mxu0 %v162
    %v450 = vpop.f32.mrf.mxu0
    %v451 = vadd.f32 0.0, %v450
    %v452 = vpop.f32.mrf.mxu0
    %v453 = vpop.f32.mrf.mxu0
    %v454 = vadd.f32 0.0, %v453
    %v455 = vpop.f32.mrf.mxu0
    %456 = vmatprep.mubr.bf16.mxu0 0
    %457 = vmatmul.mubr.bf16.gmra.mxu0 %v163
    %v458 = vpop.f32.mrf.mxu0
    %v459 = vadd.f32 0.0, %v458
    %v460 = vpop.f32.mrf.mxu0
    %v461 = vpop.f32.mrf.mxu0
    %v462 = vadd.f32 0.0, %v461
    %v463 = vpop.f32.mrf.mxu0
    %464 = vmatprep.mubr.bf16.mxu0 0
    %465 = vmatmul.mubr.bf16.gmra.mxu0 %v164
    %v466 = vpop.f32.mrf.mxu0
    %v467 = vadd.f32 0.0, %v466
    %v468 = vpop.f32.mrf.mxu0
    %v469 = vpop.f32.mrf.mxu0
    %v470 = vadd.f32 0.0, %v469
    %v471 = vpop.f32.mrf.mxu0
    %472 = vdwg.mxu0
    %v473 = vrot.slane %v334, 1
    %v474 = vrot.slane %v336, 1
    %v475 = vrot.slane %v427, 1
    %v476 = vrot.slane %v338, 1
    %v477 = vrot.slane %v340, 1
    %v478 = vrot.slane %v430, 1
    %v479 = vrot.slane %v344, 1
    %v480 = vrot.slane %v346, 1
    %v481 = vrot.slane %v435, 1
    %v482 = vrot.slane %v348, 1
    %v483 = vrot.slane %v350, 1
    %v484 = vrot.slane %v438, 1
    %v485 = vrot.slane %v354, 1
    %v486 = vrot.slane %v356, 1
    %v487 = vrot.slane %v443, 1
    %v488 = vrot.slane %v358, 1
    %v489 = vrot.slane %v360, 1
    %v490 = vrot.slane %v446, 1
    %v491 = vrot.slane %v364, 1
    %v492 = vrot.slane %v366, 1
    %v493 = vrot.slane %v451, 1
    %v494 = vrot.slane %v368, 1
    %v495 = vrot.slane %v370, 1
    %v496 = vrot.slane %v454, 1
    %v497 = vrot.slane %v374, 1
    %v498 = vrot.slane %v376, 1
    %v499 = vrot.slane %v459, 1
    %v500 = vrot.slane %v378, 1
    %v501 = vrot.slane %v380, 1
    %v502 = vrot.slane %v462, 1
    %v503 = vrot.slane %v384, 1
    %v504 = vrot.slane %v386, 1
    %v505 = vrot.slane %v467, 1
    %v506 = vrot.slane %v388, 1
    %v507 = vrot.slane %v390, 1
    %v508 = vrot.slane %v470, 1
    %v509 = vlaneseq
    %v510 = vshrl.u32 %v509, 7
    %vm511 = vcmp.lt.s32.totalorder %v510, 7
    %v512 = vsel %vm511, %v503, %v506
    %v513 = vsel %vm511, %v504, %v507
    %v514 = vsel %vm511, %v505, %v508
    %v515 = vsel %vm511, %v500, %v503
    %v516 = vsel %vm511, %v501, %v504
    %v517 = vsel %vm511, %v502, %v505
    %v518 = vsel %vm511, %v497, %v500
    %v519 = vsel %vm511, %v498, %v501
    %v520 = vsel %vm511, %v499, %v502
    %v521 = vsel %vm511, %v494, %v497
    %v522 = vsel %vm511, %v495, %v498
    %v523 = vsel %vm511, %v496, %v499
    %v524 = vsel %vm511, %v491, %v494
    %v525 = vsel %vm511, %v492, %v495
    %v526 = vsel %vm511, %v493, %v496
    %v527 = vsel %vm511, %v488, %v491
    %v528 = vsel %vm511, %v489, %v492
    %v529 = vsel %vm511, %v490, %v493
    %v530 = vsel %vm511, %v485, %v488
    %v531 = vsel %vm511, %v486, %v489
    %v532 = vsel %vm511, %v487, %v490
    %v533 = vsel %vm511, %v482, %v485
    %v534 = vsel %vm511, %v483, %v486
    %v535 = vsel %vm511, %v484, %v487
    %v536 = vsel %vm511, %v479, %v482
    %v537 = vsel %vm511, %v480, %v483
    %v538 = vsel %vm511, %v481, %v484
    %v539 = vsel %vm511, %v476, %v479
    %v540 = vsel %vm511, %v477, %v480
    %v541 = vsel %vm511, %v478, %v481
    %v542 = vsel %vm511, %v473, %v476
    %v543 = vsel %vm511, %v474, %v477
    %v544 = vsel %vm511, %v475, %v478
    %v545 = vsel %vm511, %v506, %v473
    %v546 = vsel %vm511, %v507, %v474
    %v547 = vsel %vm511, %v508, %v475
    %v580 = vunpack.c.l.b16 %v70
    %v581 = vunpack.c.h.b16 %v70
    %v582 = vunpack.c.l.b16 %v71
    %v583 = vunpack.c.l.b16 %v72
    %v584 = vunpack.c.h.b16 %v72
    %v585 = vunpack.c.l.b16 %v73
    %v586 = vunpack.c.l.b16 %v74
    %v587 = vunpack.c.h.b16 %v74
    %v588 = vunpack.c.l.b16 %v75
    %v589 = vunpack.c.l.b16 %v76
    %v590 = vunpack.c.h.b16 %v76
    %v591 = vunpack.c.l.b16 %v77
    %v592 = vunpack.c.l.b16 %v78
    %v593 = vunpack.c.h.b16 %v78
    %v594 = vunpack.c.l.b16 %v79
    %v595 = vunpack.c.l.b16 %v80
    %v596 = vunpack.c.h.b16 %v80
    %v597 = vunpack.c.l.b16 %v81
    %v598 = vunpack.c.l.b16 %v82
    %v599 = vunpack.c.h.b16 %v82
    %v600 = vunpack.c.l.b16 %v83
    %v601 = vunpack.c.l.b16 %v84
    %v602 = vunpack.c.h.b16 %v84
    %v603 = vunpack.c.l.b16 %v85
    %v604 = vunpack.c.l.b16 %v86
    %v605 = vunpack.c.h.b16 %v86
    %v606 = vunpack.c.l.b16 %v87
    %v607 = vunpack.c.l.b16 %v88
    %v608 = vunpack.c.h.b16 %v88
    %v609 = vunpack.c.l.b16 %v89
    %v610 = vunpack.c.l.b16 %v90
    %v611 = vunpack.c.h.b16 %v90
    %v612 = vunpack.c.l.b16 %v91
    %v613 = vunpack.c.l.b16 %v92
    %v614 = vunpack.c.h.b16 %v92
    %v615 = vunpack.c.l.b16 %v93
    %v616 = vunpack.c.l.b16 %v94
    %v617 = vunpack.c.h.b16 %v94
    %v618 = vunpack.c.l.b16 %v95
    %v619 = vunpack.c.l.b16 %v96
    %v620 = vunpack.c.h.b16 %v96
    %v621 = vunpack.c.l.b16 %v97
    %v622 = vunpack.c.l.b16 %v98
    %v623 = vunpack.c.h.b16 %v98
    %v624 = vunpack.c.l.b16 %v99
    %v625 = vunpack.c.l.b16 %v100
    %v626 = vunpack.c.h.b16 %v100
    %v627 = vunpack.c.l.b16 %v101
    %v628 = vpack.c.b16 %v583, %v580
    %v629 = vpack.c.b16 %v584, %v581
    %v630 = vpack.c.b16 %v585, %v582
    %v631 = vpack.c.b16 %v589, %v586
    %v632 = vpack.c.b16 %v590, %v587
    %v633 = vpack.c.b16 %v591, %v588
    %v634 = vpack.c.b16 %v595, %v592
    %v635 = vpack.c.b16 %v596, %v593
    %v636 = vpack.c.b16 %v597, %v594
    %v637 = vpack.c.b16 %v601, %v598
    %v638 = vpack.c.b16 %v602, %v599
    %v639 = vpack.c.b16 %v603, %v600
    %v640 = vpack.c.b16 %v607, %v604
    %v641 = vpack.c.b16 %v608, %v605
    %v642 = vpack.c.b16 %v609, %v606
    %v643 = vpack.c.b16 %v613, %v610
    %v644 = vpack.c.b16 %v614, %v611
    %v645 = vpack.c.b16 %v615, %v612
    %v646 = vpack.c.b16 %v619, %v616
    %v647 = vpack.c.b16 %v620, %v617
    %v648 = vpack.c.b16 %v621, %v618
    %v649 = vpack.c.b16 %v625, %v622
    %v650 = vpack.c.b16 %v626, %v623
    %v651 = vpack.c.b16 %v627, %v624
    %676 = vmatprep.subr.bf16.mxu0 %v650
    %677 = vmatpush1.bf16.msra.mxu0 %v649
    %678 = vmatprep.subr.bf16.mxu0 %v647
    %679 = vmatpush1.bf16.msra.mxu0 %v646
    %680 = vmatprep.subr.bf16.mxu0 %v644
    %681 = vmatpush1.bf16.msra.mxu0 %v643
    %682 = vmatprep.subr.bf16.mxu0 %v641
    %683 = vmatpush1.bf16.msra.mxu0 %v640
    %684 = vmatprep.subr.bf16.mxu0 %v638
    %685 = vmatpush1.bf16.msra.mxu0 %v637
    %686 = vmatprep.subr.bf16.mxu0 %v635
    %687 = vmatpush1.bf16.msra.mxu0 %v634
    %688 = vmatprep.subr.bf16.mxu0 %v632
    %689 = vmatpush1.bf16.msra.mxu0 %v631
    %690 = vmatprep.subr.bf16.mxu0 %v629
    %691 = vmatpush1.bf16.msra.mxu0 %v628
    %692 = vmatprep.subr.bf16.mxu0 0
    %693 = vmatpush2.bf16.msra.mxu0 0
    %694 = vmatprep.subr.bf16.mxu0 0
    %695 = vmatpush2.bf16.msra.mxu0 0
    %696 = vmatprep.subr.bf16.mxu0 0
    %697 = vmatpush2.bf16.msra.mxu0 0
    %698 = vmatprep.subr.bf16.mxu0 0
    %699 = vmatpush2.bf16.msra.mxu0 0
    %700 = vmatprep.subr.bf16.mxu0 0
    %701 = vmatpush2.bf16.msra.mxu0 0
    %702 = vmatprep.subr.bf16.mxu0 0
    %703 = vmatpush2.bf16.msra.mxu0 0
    %704 = vmatprep.subr.bf16.mxu0 0
    %705 = vmatpush2.bf16.msra.mxu0 0
    %706 = vmatprep.subr.bf16.mxu0 0
    %707 = vmatpush2.bf16.msra.mxu0 0
    %708 = vmatprep.mubr.bf16.mxu0 0
    %709 = vmatmul.mubr.bf16.gmra.mxu0 %v159
    %v710 = vpop.f32.mrf.mxu0
    %v711 = vadd.f32 %v542, %v710
    %v712 = vpop.f32.mrf.mxu0
    %v713 = vadd.f32 %v543, %v712
    %v714 = vpop.f32.mrf.mxu0
    %v715 = vadd.f32 %v539, %v714
    %v716 = vpop.f32.mrf.mxu0
    %v717 = vadd.f32 %v540, %v716
    %718 = vmatprep.mubr.bf16.mxu0 0
    %719 = vmatmul.mubr.bf16.gmra.mxu0 %v160
    %v720 = vpop.f32.mrf.mxu0
    %v721 = vadd.f32 %v536, %v720
    %v722 = vpop.f32.mrf.mxu0
    %v723 = vadd.f32 %v537, %v722
    %v724 = vpop.f32.mrf.mxu0
    %v725 = vadd.f32 %v533, %v724
    %v726 = vpop.f32.mrf.mxu0
    %v727 = vadd.f32 %v534, %v726
    %728 = vmatprep.mubr.bf16.mxu0 0
    %729 = vmatmul.mubr.bf16.gmra.mxu0 %v161
    %v730 = vpop.f32.mrf.mxu0
    %v731 = vadd.f32 %v530, %v730
    %v732 = vpop.f32.mrf.mxu0
    %v733 = vadd.f32 %v531, %v732
    %v734 = vpop.f32.mrf.mxu0
    %v735 = vadd.f32 %v527, %v734
    %v736 = vpop.f32.mrf.mxu0
    %v737 = vadd.f32 %v528, %v736
    %738 = vmatprep.mubr.bf16.mxu0 0
    %739 = vmatmul.mubr.bf16.gmra.mxu0 %v162
    %v740 = vpop.f32.mrf.mxu0
    %v741 = vadd.f32 %v524, %v740
    %v742 = vpop.f32.mrf.mxu0
    %v743 = vadd.f32 %v525, %v742
    %v744 = vpop.f32.mrf.mxu0
    %v745 = vadd.f32 %v521, %v744
    %v746 = vpop.f32.mrf.mxu0
    %v747 = vadd.f32 %v522, %v746
    %748 = vmatprep.mubr.bf16.mxu0 0
    %749 = vmatmul.mubr.bf16.gmra.mxu0 %v163
    %v750 = vpop.f32.mrf.mxu0
    %v751 = vadd.f32 %v518, %v750
    %v752 = vpop.f32.mrf.mxu0
    %v753 = vadd.f32 %v519, %v752
    %v754 = vpop.f32.mrf.mxu0
    %v755 = vadd.f32 %v515, %v754
    %v756 = vpop.f32.mrf.mxu0
    %v757 = vadd.f32 %v516, %v756
    %758 = vmatprep.mubr.bf16.mxu0 0
    %759 = vmatmul.mubr.bf16.gmra.mxu0 %v164
    %v760 = vpop.f32.mrf.mxu0
    %v761 = vadd.f32 %v512, %v760
    %v762 = vpop.f32.mrf.mxu0
    %v763 = vadd.f32 %v513, %v762
    %v764 = vpop.f32.mrf.mxu0
    %v765 = vadd.f32 %v545, %v764
    %v766 = vpop.f32.mrf.mxu0
    %v767 = vadd.f32 %v546, %v766
    %768 = vdwg.mxu0
    %769 = vmatprep.subr.bf16.mxu0 0
    %770 = vmatpush1.bf16.msra.mxu0 %v651
    %771 = vmatprep.subr.bf16.mxu0 0
    %772 = vmatpush1.bf16.msra.mxu0 %v648
    %773 = vmatprep.subr.bf16.mxu0 0
    %774 = vmatpush1.bf16.msra.mxu0 %v645
    %775 = vmatprep.subr.bf16.mxu0 0
    %776 = vmatpush1.bf16.msra.mxu0 %v642
    %777 = vmatprep.subr.bf16.mxu0 0
    %778 = vmatpush1.bf16.msra.mxu0 %v639
    %779 = vmatprep.subr.bf16.mxu0 0
    %780 = vmatpush1.bf16.msra.mxu0 %v636
    %781 = vmatprep.subr.bf16.mxu0 0
    %782 = vmatpush1.bf16.msra.mxu0 %v633
    %783 = vmatprep.subr.bf16.mxu0 0
    %784 = vmatpush1.bf16.msra.mxu0 %v630
    %785 = vmatprep.subr.bf16.mxu0 0
    %786 = vmatpush2.bf16.msra.mxu0 0
    %787 = vmatprep.subr.bf16.mxu0 0
    %788 = vmatpush2.bf16.msra.mxu0 0
    %789 = vmatprep.subr.bf16.mxu0 0
    %790 = vmatpush2.bf16.msra.mxu0 0
    %791 = vmatprep.subr.bf16.mxu0 0
    %792 = vmatpush2.bf16.msra.mxu0 0
    %793 = vmatprep.subr.bf16.mxu0 0
    %794 = vmatpush2.bf16.msra.mxu0 0
    %795 = vmatprep.subr.bf16.mxu0 0
    %796 = vmatpush2.bf16.msra.mxu0 0
    %797 = vmatprep.subr.bf16.mxu0 0
    %798 = vmatpush2.bf16.msra.mxu0 0
    %799 = vmatprep.subr.bf16.mxu0 0
    %800 = vmatpush2.bf16.msra.mxu0 0
    %801 = vmatprep.mubr.bf16.mxu0 0
    %802 = vmatmul.mubr.bf16.gmra.mxu0 %v159
    %v803 = vpop.f32.mrf.mxu0
    %v804 = vadd.f32 %v544, %v803
    %v805 = vpop.f32.mrf.mxu0
    %v806 = vpop.f32.mrf.mxu0
    %v807 = vadd.f32 %v541, %v806
    %v808 = vpop.f32.mrf.mxu0
    %809 = vmatprep.mubr.bf16.mxu0 0
    %810 = vmatmul.mubr.bf16.gmra.mxu0 %v160
    %v811 = vpop.f32.mrf.mxu0
    %v812 = vadd.f32 %v538, %v811
    %v813 = vpop.f32.mrf.mxu0
    %v814 = vpop.f32.mrf.mxu0
    %v815 = vadd.f32 %v535, %v814
    %v816 = vpop.f32.mrf.mxu0
    %817 = vmatprep.mubr.bf16.mxu0 0
    %818 = vmatmul.mubr.bf16.gmra.mxu0 %v161
    %v819 = vpop.f32.mrf.mxu0
    %v820 = vadd.f32 %v532, %v819
    %v821 = vpop.f32.mrf.mxu0
    %v822 = vpop.f32.mrf.mxu0
    %v823 = vadd.f32 %v529, %v822
    %v824 = vpop.f32.mrf.mxu0
    %825 = vmatprep.mubr.bf16.mxu0 0
    %826 = vmatmul.mubr.bf16.gmra.mxu0 %v162
    %v827 = vpop.f32.mrf.mxu0
    %v828 = vadd.f32 %v526, %v827
    %v829 = vpop.f32.mrf.mxu0
    %v830 = vpop.f32.mrf.mxu0
    %v831 = vadd.f32 %v523, %v830
    %v832 = vpop.f32.mrf.mxu0
    %833 = vmatprep.mubr.bf16.mxu0 0
    %834 = vmatmul.mubr.bf16.gmra.mxu0 %v163
    %v835 = vpop.f32.mrf.mxu0
    %v836 = vadd.f32 %v520, %v835
    %v837 = vpop.f32.mrf.mxu0
    %v838 = vpop.f32.mrf.mxu0
    %v839 = vadd.f32 %v517, %v838
    %v840 = vpop.f32.mrf.mxu0
    %841 = vmatprep.mubr.bf16.mxu0 0
    %842 = vmatmul.mubr.bf16.gmra.mxu0 %v164
    %v843 = vpop.f32.mrf.mxu0
    %v844 = vadd.f32 %v514, %v843
    %v845 = vpop.f32.mrf.mxu0
    %v846 = vpop.f32.mrf.mxu0
    %v847 = vadd.f32 %v547, %v846
    %v848 = vpop.f32.mrf.mxu0
    %849 = vdwg.mxu0
    %s850 = scalar_lea.vmem [#allocation5], 384
    %v851 = vld [vmem:[%s850] sm:$0xff]
    %v852 = vld [vmem:[%s850 + $0x8] sm:$0xf]
    %v853 = vld [vmem:[%s850 + $0xc] sm:$0xff]
    %v854 = vld [vmem:[%s850 + $0x14] sm:$0xf]
    %v855 = vld [vmem:[%s850 + $0x18] sm:$0xff]
    %v856 = vld [vmem:[%s850 + $0x20] sm:$0xf]
    %v857 = vld [vmem:[%s850 + $0x24] sm:$0xff]
    %v858 = vld [vmem:[%s850 + $0x2c] sm:$0xf]
    %v859 = vld [vmem:[%s850 + $0x30] sm:$0xff]
    %v860 = vld [vmem:[%s850 + $0x38] sm:$0xf]
    %v861 = vld [vmem:[%s850 + $0x3c] sm:$0xff]
    %v862 = vld [vmem:[%s850 + $0x44] sm:$0xf]
    %v863 = vld [vmem:[%s850 + $0x48] sm:$0xff]
    %v864 = vld [vmem:[%s850 + $0x50] sm:$0xf]
    %v865 = vld [vmem:[%s850 + $0x54] sm:$0xff]
    %v866 = vld [vmem:[%s850 + $0x5c] sm:$0xf]
    %v867 = vld [vmem:[%s850 + $0x60] sm:$0xff]
    %v868 = vld [vmem:[%s850 + $0x68] sm:$0xf]
    %v869 = vld [vmem:[%s850 + $0x6c] sm:$0xff]
    %v870 = vld [vmem:[%s850 + $0x74] sm:$0xf]
    %v871 = vld [vmem:[%s850 + $0x78] sm:$0xff]
    %v872 = vld [vmem:[%s850 + $0x80] sm:$0xf]
    %v873 = vld [vmem:[%s850 + $0x84] sm:$0xff]
    %v874 = vld [vmem:[%s850 + $0x8c] sm:$0xf]
    %v875 = vld [vmem:[%s850 + $0x90] sm:$0xff]
    %v876 = vld [vmem:[%s850 + $0x98] sm:$0xf]
    %v877 = vld [vmem:[%s850 + $0x9c] sm:$0xff]
    %v878 = vld [vmem:[%s850 + $0xa4] sm:$0xf]
    %v879 = vld [vmem:[%s850 + $0xa8] sm:$0xff]
    %v880 = vld [vmem:[%s850 + $0xb0] sm:$0xf]
    %v881 = vld [vmem:[%s850 + $0xb4] sm:$0xff]
    %v882 = vld [vmem:[%s850 + $0xbc] sm:$0xf]
    %v915 = vunpack.c.l.b16 %v851
    %v916 = vunpack.c.h.b16 %v851
    %v917 = vunpack.c.l.b16 %v852
    %v918 = vunpack.c.l.b16 %v853
    %v919 = vunpack.c.h.b16 %v853
    %v920 = vunpack.c.l.b16 %v854
    %v921 = vunpack.c.l.b16 %v855
    %v922 = vunpack.c.h.b16 %v855
    %v923 = vunpack.c.l.b16 %v856
    %v924 = vunpack.c.l.b16 %v857
    %v925 = vunpack.c.h.b16 %v857
    %v926 = vunpack.c.l.b16 %v858
    %v927 = vunpack.c.l.b16 %v859
    %v928 = vunpack.c.h.b16 %v859
    %v929 = vunpack.c.l.b16 %v860
    %v930 = vunpack.c.l.b16 %v861
    %v931 = vunpack.c.h.b16 %v861
    %v932 = vunpack.c.l.b16 %v862
    %v933 = vunpack.c.l.b16 %v863
    %v934 = vunpack.c.h.b16 %v863
    %v935 = vunpack.c.l.b16 %v864
    %v936 = vunpack.c.l.b16 %v865
    %v937 = vunpack.c.h.b16 %v865
    %v938 = vunpack.c.l.b16 %v866
    %v939 = vunpack.c.l.b16 %v867
    %v940 = vunpack.c.h.b16 %v867
    %v941 = vunpack.c.l.b16 %v868
    %v942 = vunpack.c.l.b16 %v869
    %v943 = vunpack.c.h.b16 %v869
    %v944 = vunpack.c.l.b16 %v870
    %v945 = vunpack.c.l.b16 %v871
    %v946 = vunpack.c.h.b16 %v871
    %v947 = vunpack.c.l.b16 %v872
    %v948 = vunpack.c.l.b16 %v873
    %v949 = vunpack.c.h.b16 %v873
    %v950 = vunpack.c.l.b16 %v874
    %v951 = vunpack.c.l.b16 %v875
    %v952 = vunpack.c.h.b16 %v875
    %v953 = vunpack.c.l.b16 %v876
    %v954 = vunpack.c.l.b16 %v877
    %v955 = vunpack.c.h.b16 %v877
    %v956 = vunpack.c.l.b16 %v878
    %v957 = vunpack.c.l.b16 %v879
    %v958 = vunpack.c.h.b16 %v879
    %v959 = vunpack.c.l.b16 %v880
    %v960 = vunpack.c.l.b16 %v881
    %v961 = vunpack.c.h.b16 %v881
    %v962 = vunpack.c.l.b16 %v882
    %v963 = vpack.c.b16 %v918, %v915
    %v964 = vpack.c.b16 %v919, %v916
    %v965 = vpack.c.b16 %v920, %v917
    %v966 = vpack.c.b16 %v924, %v921
    %v967 = vpack.c.b16 %v925, %v922
    %v968 = vpack.c.b16 %v926, %v923
    %v969 = vpack.c.b16 %v930, %v927
    %v970 = vpack.c.b16 %v931, %v928
    %v971 = vpack.c.b16 %v932, %v929
    %v972 = vpack.c.b16 %v936, %v933
    %v973 = vpack.c.b16 %v937, %v934
    %v974 = vpack.c.b16 %v938, %v935
    %v975 = vpack.c.b16 %v942, %v939
    %v976 = vpack.c.b16 %v943, %v940
    %v977 = vpack.c.b16 %v944, %v941
    %v978 = vpack.c.b16 %v948, %v945
    %v979 = vpack.c.b16 %v949, %v946
    %v980 = vpack.c.b16 %v950, %v947
    %v981 = vpack.c.b16 %v954, %v951
    %v982 = vpack.c.b16 %v955, %v952
    %v983 = vpack.c.b16 %v956, %v953
    %v984 = vpack.c.b16 %v960, %v957
    %v985 = vpack.c.b16 %v961, %v958
    %v986 = vpack.c.b16 %v962, %v959
    %1011 = vmatprep.subr.bf16.mxu0 %v985
    %1012 = vmatpush1.bf16.msra.mxu0 %v984
    %1013 = vmatprep.subr.bf16.mxu0 %v982
    %1014 = vmatpush1.bf16.msra.mxu0 %v981
    %1015 = vmatprep.subr.bf16.mxu0 %v979
    %1016 = vmatpush1.bf16.msra.mxu0 %v978
    %1017 = vmatprep.subr.bf16.mxu0 %v976
    %1018 = vmatpush1.bf16.msra.mxu0 %v975
    %1019 = vmatprep.subr.bf16.mxu0 %v973
    %1020 = vmatpush1.bf16.msra.mxu0 %v972
    %1021 = vmatprep.subr.bf16.mxu0 %v970
    %1022 = vmatpush1.bf16.msra.mxu0 %v969
    %1023 = vmatprep.subr.bf16.mxu0 %v967
    %1024 = vmatpush1.bf16.msra.mxu0 %v966
    %1025 = vmatprep.subr.bf16.mxu0 %v964
    %1026 = vmatpush1.bf16.msra.mxu0 %v963
    %1027 = vmatprep.subr.bf16.mxu0 0
    %1028 = vmatpush2.bf16.msra.mxu0 0
    %1029 = vmatprep.subr.bf16.mxu0 0
    %1030 = vmatpush2.bf16.msra.mxu0 0
    %1031 = vmatprep.subr.bf16.mxu0 0
    %1032 = vmatpush2.bf16.msra.mxu0 0
    %1033 = vmatprep.subr.bf16.mxu0 0
    %1034 = vmatpush2.bf16.msra.mxu0 0
    %1035 = vmatprep.subr.bf16.mxu0 0
    %1036 = vmatpush2.bf16.msra.mxu0 0
    %1037 = vmatprep.subr.bf16.mxu0 0
    %1038 = vmatpush2.bf16.msra.mxu0 0
    %1039 = vmatprep.subr.bf16.mxu0 0
    %1040 = vmatpush2.bf16.msra.mxu0 0
    %1041 = vmatprep.subr.bf16.mxu0 0
    %1042 = vmatpush2.bf16.msra.mxu0 0
    %1043 = vmatprep.mubr.bf16.mxu0 0
    %1044 = vmatmul.mubr.bf16.gmra.mxu0 %v159
    %v1045 = vpop.f32.mrf.mxu0
    %v1046 = vadd.f32 0.0, %v1045
    %v1047 = vpop.f32.mrf.mxu0
    %v1048 = vadd.f32 0.0, %v1047
    %v1049 = vpop.f32.mrf.mxu0
    %v1050 = vadd.f32 0.0, %v1049
    %v1051 = vpop.f32.mrf.mxu0
    %v1052 = vadd.f32 0.0, %v1051
    %1053 = vmatprep.mubr.bf16.mxu0 0
    %1054 = vmatmul.mubr.bf16.gmra.mxu0 %v160
    %v1055 = vpop.f32.mrf.mxu0
    %v1056 = vadd.f32 0.0, %v1055
    %v1057 = vpop.f32.mrf.mxu0
    %v1058 = vadd.f32 0.0, %v1057
    %v1059 = vpop.f32.mrf.mxu0
    %v1060 = vadd.f32 0.0, %v1059
    %v1061 = vpop.f32.mrf.mxu0
    %v1062 = vadd.f32 0.0, %v1061
    %1063 = vmatprep.mubr.bf16.mxu0 0
    %1064 = vmatmul.mubr.bf16.gmra.mxu0 %v161
    %v1065 = vpop.f32.mrf.mxu0
    %v1066 = vadd.f32 0.0, %v1065
    %v1067 = vpop.f32.mrf.mxu0
    %v1068 = vadd.f32 0.0, %v1067
    %v1069 = vpop.f32.mrf.mxu0
    %v1070 = vadd.f32 0.0, %v1069
    %v1071 = vpop.f32.mrf.mxu0
    %v1072 = vadd.f32 0.0, %v1071
    %1073 = vmatprep.mubr.bf16.mxu0 0
    %1074 = vmatmul.mubr.bf16.gmra.mxu0 %v162
    %v1075 = vpop.f32.mrf.mxu0
    %v1076 = vadd.f32 0.0, %v1075
    %v1077 = vpop.f32.mrf.mxu0
    %v1078 = vadd.f32 0.0, %v1077
    %v1079 = vpop.f32.mrf.mxu0
    %v1080 = vadd.f32 0.0, %v1079
    %v1081 = vpop.f32.mrf.mxu0
    %v1082 = vadd.f32 0.0, %v1081
    %1083 = vmatprep.mubr.bf16.mxu0 0
    %1084 = vmatmul.mubr.bf16.gmra.mxu0 %v163
    %v1085 = vpop.f32.mrf.mxu0
    %v1086 = vadd.f32 0.0, %v1085
    %v1087 = vpop.f32.mrf.mxu0
    %v1088 = vadd.f32 0.0, %v1087
    %v1089 = vpop.f32.mrf.mxu0
    %v1090 = vadd.f32 0.0, %v1089
    %v1091 = vpop.f32.mrf.mxu0
    %v1092 = vadd.f32 0.0, %v1091
    %1093 = vmatprep.mubr.bf16.mxu0 0
    %1094 = vmatmul.mubr.bf16.gmra.mxu0 %v164
    %v1095 = vpop.f32.mrf.mxu0
    %v1096 = vadd.f32 0.0, %v1095
    %v1097 = vpop.f32.mrf.mxu0
    %v1098 = vadd.f32 0.0, %v1097
    %v1099 = vpop.f32.mrf.mxu0
    %v1100 = vadd.f32 0.0, %v1099
    %v1101 = vpop.f32.mrf.mxu0
    %v1102 = vadd.f32 0.0, %v1101
    %1103 = vdwg.mxu0
    %1104 = vmatprep.subr.bf16.mxu0 0
    %1105 = vmatpush1.bf16.msra.mxu0 %v986
    %1106 = vmatprep.subr.bf16.mxu0 0
    %1107 = vmatpush1.bf16.msra.mxu0 %v983
    %1108 = vmatprep.subr.bf16.mxu0 0
    %1109 = vmatpush1.bf16.msra.mxu0 %v980
    %1110 = vmatprep.subr.bf16.mxu0 0
    %1111 = vmatpush1.bf16.msra.mxu0 %v977
    %1112 = vmatprep.subr.bf16.mxu0 0
    %1113 = vmatpush1.bf16.msra.mxu0 %v974
    %1114 = vmatprep.subr.bf16.mxu0 0
    %1115 = vmatpush1.bf16.msra.mxu0 %v971
    %1116 = vmatprep.subr.bf16.mxu0 0
    %1117 = vmatpush1.bf16.msra.mxu0 %v968
    %1118 = vmatprep.subr.bf16.mxu0 0
    %1119 = vmatpush1.bf16.msra.mxu0 %v965
    %1120 = vmatprep.subr.bf16.mxu0 0
    %1121 = vmatpush2.bf16.msra.mxu0 0
    %1122 = vmatprep.subr.bf16.mxu0 0
    %1123 = vmatpush2.bf16.msra.mxu0 0
    %1124 = vmatprep.subr.bf16.mxu0 0
    %1125 = vmatpush2.bf16.msra.mxu0 0
    %1126 = vmatprep.subr.bf16.mxu0 0
    %1127 = vmatpush2.bf16.msra.mxu0 0
    %1128 = vmatprep.subr.bf16.mxu0 0
    %1129 = vmatpush2.bf16.msra.mxu0 0
    %1130 = vmatprep.subr.bf16.mxu0 0
    %1131 = vmatpush2.bf16.msra.mxu0 0
    %1132 = vmatprep.subr.bf16.mxu0 0
    %1133 = vmatpush2.bf16.msra.mxu0 0
    %1134 = vmatprep.subr.bf16.mxu0 0
    %1135 = vmatpush2.bf16.msra.mxu0 0
    %1136 = vmatprep.mubr.bf16.mxu0 0
    %1137 = vmatmul.mubr.bf16.gmra.mxu0 %v159
    %v1138 = vpop.f32.mrf.mxu0
    %v1139 = vadd.f32 0.0, %v1138
    %v1140 = vpop.f32.mrf.mxu0
    %v1141 = vpop.f32.mrf.mxu0
    %v1142 = vadd.f32 0.0, %v1141
    %v1143 = vpop.f32.mrf.mxu0
    %1144 = vmatprep.mubr.bf16.mxu0 0
    %1145 = vmatmul.mubr.bf16.gmra.mxu0 %v160
    %v1146 = vpop.f32.mrf.mxu0
    %v1147 = vadd.f32 0.0, %v1146
    %v1148 = vpop.f32.mrf.mxu0
    %v1149 = vpop.f32.mrf.mxu0
    %v1150 = vadd.f32 0.0, %v1149
    %v1151 = vpop.f32.mrf.mxu0
    %1152 = vmatprep.mubr.bf16.mxu0 0
    %1153 = vmatmul.mubr.bf16.gmra.mxu0 %v161
    %v1154 = vpop.f32.mrf.mxu0
    %v1155 = vadd.f32 0.0, %v1154
    %v1156 = vpop.f32.mrf.mxu0
    %v1157 = vpop.f32.mrf.mxu0
    %v1158 = vadd.f32 0.0, %v1157
    %v1159 = vpop.f32.mrf.mxu0
    %1160 = vmatprep.mubr.bf16.mxu0 0
    %1161 = vmatmul.mubr.bf16.gmra.mxu0 %v162
    %v1162 = vpop.f32.mrf.mxu0
    %v1163 = vadd.f32 0.0, %v1162
    %v1164 = vpop.f32.mrf.mxu0
    %v1165 = vpop.f32.mrf.mxu0
    %v1166 = vadd.f32 0.0, %v1165
    %v1167 = vpop.f32.mrf.mxu0
    %1168 = vmatprep.mubr.bf16.mxu0 0
    %1169 = vmatmul.mubr.bf16.gmra.mxu0 %v163
    %v1170 = vpop.f32.mrf.mxu0
    %v1171 = vadd.f32 0.0, %v1170
    %v1172 = vpop.f32.mrf.mxu0
    %v1173 = vpop.f32.mrf.mxu0
    %v1174 = vadd.f32 0.0, %v1173
    %v1175 = vpop.f32.mrf.mxu0
    %1176 = vmatprep.mubr.bf16.mxu0 0
    %1177 = vmatmul.mubr.bf16.gmra.mxu0 %v164
    %v1178 = vpop.f32.mrf.mxu0
    %v1179 = vadd.f32 0.0, %v1178
    %v1180 = vpop.f32.mrf.mxu0
    %v1181 = vpop.f32.mrf.mxu0
    %v1182 = vadd.f32 0.0, %v1181
    %v1183 = vpop.f32.mrf.mxu0
    %1184 = vdwg.mxu0
    %v1185 = vrot.slane %v1046, 2
    %v1186 = vrot.slane %v1048, 2
    %v1187 = vrot.slane %v1139, 2
    %v1188 = vrot.slane %v1050, 2
    %v1189 = vrot.slane %v1052, 2
    %v1190 = vrot.slane %v1142, 2
    %v1191 = vrot.slane %v1056, 2
    %v1192 = vrot.slane %v1058, 2
    %v1193 = vrot.slane %v1147, 2
    %v1194 = vrot.slane %v1060, 2
    %v1195 = vrot.slane %v1062, 2
    %v1196 = vrot.slane %v1150, 2
    %v1197 = vrot.slane %v1066, 2
    %v1198 = vrot.slane %v1068, 2
    %v1199 = vrot.slane %v1155, 2
    %v1200 = vrot.slane %v1070, 2
    %v1201 = vrot.slane %v1072, 2
    %v1202 = vrot.slane %v1158, 2
    %v1203 = vrot.slane %v1076, 2
    %v1204 = vrot.slane %v1078, 2
    %v1205 = vrot.slane %v1163, 2
    %v1206 = vrot.slane %v1080, 2
    %v1207 = vrot.slane %v1082, 2
    %v1208 = vrot.slane %v1166, 2
    %v1209 = vrot.slane %v1086, 2
    %v1210 = vrot.slane %v1088, 2
    %v1211 = vrot.slane %v1171, 2
    %v1212 = vrot.slane %v1090, 2
    %v1213 = vrot.slane %v1092, 2
    %v1214 = vrot.slane %v1174, 2
    %v1215 = vrot.slane %v1096, 2
    %v1216 = vrot.slane %v1098, 2
    %v1217 = vrot.slane %v1179, 2
    %v1218 = vrot.slane %v1100, 2
    %v1219 = vrot.slane %v1102, 2
    %v1220 = vrot.slane %v1182, 2
    %vm1221 = vcmp.lt.s32.totalorder %v510, 6
    %v1222 = vsel %vm1221, %v1215, %v1218
    %v1223 = vsel %vm1221, %v1216, %v1219
    %v1224 = vsel %vm1221, %v1217, %v1220
    %v1225 = vsel %vm1221, %v1212, %v1215
    %v1226 = vsel %vm1221, %v1213, %v1216
    %v1227 = vsel %vm1221, %v1214, %v1217
    %v1228 = vsel %vm1221, %v1209, %v1212
    %v1229 = vsel %vm1221, %v1210, %v1213
    %v1230 = vsel %vm1221, %v1211, %v1214
    %v1231 = vsel %vm1221, %v1206, %v1209
    %v1232 = vsel %vm1221, %v1207, %v1210
    %v1233 = vsel %vm1221, %v1208, %v1211
    %v1234 = vsel %vm1221, %v1203, %v1206
    %v1235 = vsel %vm1221, %v1204, %v1207
    %v1236 = vsel %vm1221, %v1205, %v1208
    %v1237 = vsel %vm1221, %v1200, %v1203
    %v1238 = vsel %vm1221, %v1201, %v1204
    %v1239 = vsel %vm1221, %v1202, %v1205
    %v1240 = vsel %vm1221, %v1197, %v1200
    %v1241 = vsel %vm1221, %v1198, %v1201
    %v1242 = vsel %vm1221, %v1199, %v1202
    %v1243 = vsel %vm1221, %v1194, %v1197
    %v1244 = vsel %vm1221, %v1195, %v1198
    %v1245 = vsel %vm1221, %v1196, %v1199
    %v1246 = vsel %vm1221, %v1191, %v1194
    %v1247 = vsel %vm1221, %v1192, %v1195
    %v1248 = vsel %vm1221, %v1193, %v1196
    %v1249 = vsel %vm1221, %v1188, %v1191
    %v1250 = vsel %vm1221, %v1189, %v1192
    %v1251 = vsel %vm1221, %v1190, %v1193
    %v1252 = vsel %vm1221, %v1185, %v1188
    %v1253 = vsel %vm1221, %v1186, %v1189
    %v1254 = vsel %vm1221, %v1187, %v1190
    %v1255 = vsel %vm1221, %v1218, %v1185
    %v1256 = vsel %vm1221, %v1219, %v1186
    %v1257 = vsel %vm1221, %v1220, %v1187
    %v1258 = vadd.f32 %v711, %v1252
    %v1259 = vadd.f32 %v713, %v1253
    %v1260 = vadd.f32 %v804, %v1254
    %v1261 = vadd.f32 %v715, %v1249
    %v1262 = vadd.f32 %v717, %v1250
    %v1263 = vadd.f32 %v807, %v1251
    %v1264 = vadd.f32 %v721, %v1246
    %v1265 = vadd.f32 %v723, %v1247
    %v1266 = vadd.f32 %v812, %v1248
    %v1267 = vadd.f32 %v725, %v1243
    %v1268 = vadd.f32 %v727, %v1244
    %v1269 = vadd.f32 %v815, %v1245
    %v1270 = vadd.f32 %v731, %v1240
    %v1271 = vadd.f32 %v733, %v1241
    %v1272 = vadd.f32 %v820, %v1242
    %v1273 = vadd.f32 %v735, %v1237
    %v1274 = vadd.f32 %v737, %v1238
    %v1275 = vadd.f32 %v823, %v1239
    %v1276 = vadd.f32 %v741, %v1234
    %v1277 = vadd.f32 %v743, %v1235
    %v1278 = vadd.f32 %v828, %v1236
    %v1279 = vadd.f32 %v745, %v1231
    %v1280 = vadd.f32 %v747, %v1232
    %v1281 = vadd.f32 %v831, %v1233
    %v1282 = vadd.f32 %v751, %v1228
    %v1283 = vadd.f32 %v753, %v1229
    %v1284 = vadd.f32 %v836, %v1230
    %v1285 = vadd.f32 %v755, %v1225
    %v1286 = vadd.f32 %v757, %v1226
    %v1287 = vadd.f32 %v839, %v1227
    %v1288 = vadd.f32 %v761, %v1222
    %v1289 = vadd.f32 %v763, %v1223
    %v1290 = vadd.f32 %v844, %v1224
    %v1291 = vadd.f32 %v765, %v1255
    %v1292 = vadd.f32 %v767, %v1256
    %v1293 = vadd.f32 %v847, %v1257
    %s1294 = scalar_lea.vmem [#allocation5], 576
    %v1295 = vld [vmem:[%s1294] sm:$0xff]
    %v1296 = vld [vmem:[%s1294 + $0x8] sm:$0xf]
    %v1297 = vld [vmem:[%s1294 + $0xc] sm:$0xff]
    %v1298 = vld [vmem:[%s1294 + $0x14] sm:$0xf]
    %v1299 = vld [vmem:[%s1294 + $0x18] sm:$0xff]
    %v1300 = vld [vmem:[%s1294 + $0x20] sm:$0xf]
    %v1301 = vld [vmem:[%s1294 + $0x24] sm:$0xff]
    %v1302 = vld [vmem:[%s1294 + $0x2c] sm:$0xf]
    %v1303 = vld [vmem:[%s1294 + $0x30] sm:$0xff]
    %v1304 = vld [vmem:[%s1294 + $0x38] sm:$0xf]
    %v1305 = vld [vmem:[%s1294 + $0x3c] sm:$0xff]
    %v1306 = vld [vmem:[%s1294 + $0x44] sm:$0xf]
    %v1307 = vld [vmem:[%s1294 + $0x48] sm:$0xff]
    %v1308 = vld [vmem:[%s1294 + $0x50] sm:$0xf]
    %v1309 = vld [vmem:[%s1294 + $0x54] sm:$0xff]
    %v1310 = vld [vmem:[%s1294 + $0x5c] sm:$0xf]
    %v1311 = vld [vmem:[%s1294 + $0x60] sm:$0xff]
    %v1312 = vld [vmem:[%s1294 + $0x68] sm:$0xf]
    %v1313 = vld [vmem:[%s1294 + $0x6c] sm:$0xff]
    %v1314 = vld [vmem:[%s1294 + $0x74] sm:$0xf]
    %v1315 = vld [vmem:[%s1294 + $0x78] sm:$0xff]
    %v1316 = vld [vmem:[%s1294 + $0x80] sm:$0xf]
    %v1317 = vld [vmem:[%s1294 + $0x84] sm:$0xff]
    %v1318 = vld [vmem:[%s1294 + $0x8c] sm:$0xf]
    %v1319 = vld [vmem:[%s1294 + $0x90] sm:$0xff]
    %v1320 = vld [vmem:[%s1294 + $0x98] sm:$0xf]
    %v1321 = vld [vmem:[%s1294 + $0x9c] sm:$0xff]
    %v1322 = vld [vmem:[%s1294 + $0xa4] sm:$0xf]
    %v1323 = vld [vmem:[%s1294 + $0xa8] sm:$0xff]
    %v1324 = vld [vmem:[%s1294 + $0xb0] sm:$0xf]
    %v1325 = vld [vmem:[%s1294 + $0xb4] sm:$0xff]
    %v1326 = vld [vmem:[%s1294 + $0xbc] sm:$0xf]
    %v1359 = vunpack.c.l.b16 %v1295
    %v1360 = vunpack.c.h.b16 %v1295
    %v1361 = vunpack.c.l.b16 %v1296
    %v1362 = vunpack.c.l.b16 %v1297
    %v1363 = vunpack.c.h.b16 %v1297
    %v1364 = vunpack.c.l.b16 %v1298
    %v1365 = vunpack.c.l.b16 %v1299
    %v1366 = vunpack.c.h.b16 %v1299
    %v1367 = vunpack.c.l.b16 %v1300
    %v1368 = vunpack.c.l.b16 %v1301
    %v1369 = vunpack.c.h.b16 %v1301
    %v1370 = vunpack.c.l.b16 %v1302
    %v1371 = vunpack.c.l.b16 %v1303
    %v1372 = vunpack.c.h.b16 %v1303
    %v1373 = vunpack.c.l.b16 %v1304
    %v1374 = vunpack.c.l.b16 %v1305
    %v1375 = vunpack.c.h.b16 %v1305
    %v1376 = vunpack.c.l.b16 %v1306
    %v1377 = vunpack.c.l.b16 %v1307
    %v1378 = vunpack.c.h.b16 %v1307
    %v1379 = vunpack.c.l.b16 %v1308
    %v1380 = vunpack.c.l.b16 %v1309
    %v1381 = vunpack.c.h.b16 %v1309
    %v1382 = vunpack.c.l.b16 %v1310
    %v1383 = vunpack.c.l.b16 %v1311
    %v1384 = vunpack.c.h.b16 %v1311
    %v1385 = vunpack.c.l.b16 %v1312
    %v1386 = vunpack.c.l.b16 %v1313
    %v1387 = vunpack.c.h.b16 %v1313
    %v1388 = vunpack.c.l.b16 %v1314
    %v1389 = vunpack.c.l.b16 %v1315
    %v1390 = vunpack.c.h.b16 %v1315
    %v1391 = vunpack.c.l.b16 %v1316
    %v1392 = vunpack.c.l.b16 %v1317
    %v1393 = vunpack.c.h.b16 %v1317
    %v1394 = vunpack.c.l.b16 %v1318
    %v1395 = vunpack.c.l.b16 %v1319
    %v1396 = vunpack.c.h.b16 %v1319
    %v1397 = vunpack.c.l.b16 %v1320
    %v1398 = vunpack.c.l.b16 %v1321
    %v1399 = vunpack.c.h.b16 %v1321
    %v1400 = vunpack.c.l.b16 %v1322
    %v1401 = vunpack.c.l.b16 %v1323
    %v1402 = vunpack.c.h.b16 %v1323
    %v1403 = vunpack.c.l.b16 %v1324
    %v1404 = vunpack.c.l.b16 %v1325
    %v1405 = vunpack.c.h.b16 %v1325
    %v1406 = vunpack.c.l.b16 %v1326
    %v1407 = vpack.c.b16 %v1362, %v1359
    %v1408 = vpack.c.b16 %v1363, %v1360
    %v1409 = vpack.c.b16 %v1364, %v1361
    %v1410 = vpack.c.b16 %v1368, %v1365
    %v1411 = vpack.c.b16 %v1369, %v1366
    %v1412 = vpack.c.b16 %v1370, %v1367
    %v1413 = vpack.c.b16 %v1374, %v1371
    %v1414 = vpack.c.b16 %v1375, %v1372
    %v1415 = vpack.c.b16 %v1376, %v1373
    %v1416 = vpack.c.b16 %v1380, %v1377
    %v1417 = vpack.c.b16 %v1381, %v1378
    %v1418 = vpack.c.b16 %v1382, %v1379
    %v1419 = vpack.c.b16 %v1386, %v1383
    %v1420 = vpack.c.b16 %v1387, %v1384
    %v1421 = vpack.c.b16 %v1388, %v1385
    %v1422 = vpack.c.b16 %v1392, %v1389
    %v1423 = vpack.c.b16 %v1393, %v1390
    %v1424 = vpack.c.b16 %v1394, %v1391
    %v1425 = vpack.c.b16 %v1398, %v1395
    %v1426 = vpack.c.b16 %v1399, %v1396
    %v1427 = vpack.c.b16 %v1400, %v1397
    %v1428 = vpack.c.b16 %v1404, %v1401
    %v1429 = vpack.c.b16 %v1405, %v1402
    %v1430 = vpack.c.b16 %v1406, %v1403
    %1455 = vmatprep.subr.bf16.mxu0 %v1429
    %1456 = vmatpush1.bf16.msra.mxu0 %v1428
    %1457 = vmatprep.subr.bf16.mxu0 %v1426
    %1458 = vmatpush1.bf16.msra.mxu0 %v1425
    %1459 = vmatprep.subr.bf16.mxu0 %v1423
    %1460 = vmatpush1.bf16.msra.mxu0 %v1422
    %1461 = vmatprep.subr.bf16.mxu0 %v1420
    %1462 = vmatpush1.bf16.msra.mxu0 %v1419
    %1463 = vmatprep.subr.bf16.mxu0 %v1417
    %1464 = vmatpush1.bf16.msra.mxu0 %v1416
    %1465 = vmatprep.subr.bf16.mxu0 %v1414
    %1466 = vmatpush1.bf16.msra.mxu0 %v1413
    %1467 = vmatprep.subr.bf16.mxu0 %v1411
    %1468 = vmatpush1.bf16.msra.mxu0 %v1410
    %1469 = vmatprep.subr.bf16.mxu0 %v1408
    %1470 = vmatpush1.bf16.msra.mxu0 %v1407
    %1471 = vmatprep.subr.bf16.mxu0 0
    %1472 = vmatpush2.bf16.msra.mxu0 0
    %1473 = vmatprep.subr.bf16.mxu0 0
    %1474 = vmatpush2.bf16.msra.mxu0 0
    %1475 = vmatprep.subr.bf16.mxu0 0
    %1476 = vmatpush2.bf16.msra.mxu0 0
    %1477 = vmatprep.subr.bf16.mxu0 0
    %1478 = vmatpush2.bf16.msra.mxu0 0
    %1479 = vmatprep.subr.bf16.mxu0 0
    %1480 = vmatpush2.bf16.msra.mxu0 0
    %1481 = vmatprep.subr.bf16.mxu0 0
    %1482 = vmatpush2.bf16.msra.mxu0 0
    %1483 = vmatprep.subr.bf16.mxu0 0
    %1484 = vmatpush2.bf16.msra.mxu0 0
    %1485 = vmatprep.subr.bf16.mxu0 0
    %1486 = vmatpush2.bf16.msra.mxu0 0
    %1487 = vmatprep.mubr.bf16.mxu0 0
    %1488 = vmatmul.mubr.bf16.gmra.mxu0 %v159
    %v1489 = vpop.f32.mrf.mxu0
    %v1490 = vadd.f32 0.0, %v1489
    %v1491 = vpop.f32.mrf.mxu0
    %v1492 = vadd.f32 0.0, %v1491
    %v1493 = vpop.f32.mrf.mxu0
    %v1494 = vadd.f32 0.0, %v1493
    %v1495 = vpop.f32.mrf.mxu0
    %v1496 = vadd.f32 0.0, %v1495
    %1497 = vmatprep.mubr.bf16.mxu0 0
    %1498 = vmatmul.mubr.bf16.gmra.mxu0 %v160
    %v1499 = vpop.f32.mrf.mxu0
    %v1500 = vadd.f32 0.0, %v1499
    %v1501 = vpop.f32.mrf.mxu0
    %v1502 = vadd.f32 0.0, %v1501
    %v1503 = vpop.f32.mrf.mxu0
    %v1504 = vadd.f32 0.0, %v1503
    %v1505 = vpop.f32.mrf.mxu0
    %v1506 = vadd.f32 0.0, %v1505
    %1507 = vmatprep.mubr.bf16.mxu0 0
    %1508 = vmatmul.mubr.bf16.gmra.mxu0 %v161
    %v1509 = vpop.f32.mrf.mxu0
    %v1510 = vadd.f32 0.0, %v1509
    %v1511 = vpop.f32.mrf.mxu0
    %v1512 = vadd.f32 0.0, %v1511
    %v1513 = vpop.f32.mrf.mxu0
    %v1514 = vadd.f32 0.0, %v1513
    %v1515 = vpop.f32.mrf.mxu0
    %v1516 = vadd.f32 0.0, %v1515
    %1517 = vmatprep.mubr.bf16.mxu0 0
    %1518 = vmatmul.mubr.bf16.gmra.mxu0 %v162
    %v1519 = vpop.f32.mrf.mxu0
    %v1520 = vadd.f32 0.0, %v1519
    %v1521 = vpop.f32.mrf.mxu0
    %v1522 = vadd.f32 0.0, %v1521
    %v1523 = vpop.f32.mrf.mxu0
    %v1524 = vadd.f32 0.0, %v1523
    %v1525 = vpop.f32.mrf.mxu0
    %v1526 = vadd.f32 0.0, %v1525
    %1527 = vmatprep.mubr.bf16.mxu0 0
    %1528 = vmatmul.mubr.bf16.gmra.mxu0 %v163
    %v1529 = vpop.f32.mrf.mxu0
    %v1530 = vadd.f32 0.0, %v1529
    %v1531 = vpop.f32.mrf.mxu0
    %v1532 = vadd.f32 0.0, %v1531
    %v1533 = vpop.f32.mrf.mxu0
    %v1534 = vadd.f32 0.0, %v1533
    %v1535 = vpop.f32.mrf.mxu0
    %v1536 = vadd.f32 0.0, %v1535
    %1537 = vmatprep.mubr.bf16.mxu0 0
    %1538 = vmatmul.mubr.bf16.gmra.mxu0 %v164
    %v1539 = vpop.f32.mrf.mxu0
    %v1540 = vadd.f32 0.0, %v1539
    %v1541 = vpop.f32.mrf.mxu0
    %v1542 = vadd.f32 0.0, %v1541
    %v1543 = vpop.f32.mrf.mxu0
    %v1544 = vadd.f32 0.0, %v1543
    %v1545 = vpop.f32.mrf.mxu0
    %v1546 = vadd.f32 0.0, %v1545
    %1547 = vdwg.mxu0
    %1548 = vmatprep.subr.bf16.mxu0 0
    %1549 = vmatpush1.bf16.msra.mxu0 %v1430
    %1550 = vmatprep.subr.bf16.mxu0 0
    %1551 = vmatpush1.bf16.msra.mxu0 %v1427
    %1552 = vmatprep.subr.bf16.mxu0 0
    %1553 = vmatpush1.bf16.msra.mxu0 %v1424
    %1554 = vmatprep.subr.bf16.mxu0 0
    %1555 = vmatpush1.bf16.msra.mxu0 %v1421
    %1556 = vmatprep.subr.bf16.mxu0 0
    %1557 = vmatpush1.bf16.msra.mxu0 %v1418
    %1558 = vmatprep.subr.bf16.mxu0 0
    %1559 = vmatpush1.bf16.msra.mxu0 %v1415
    %1560 = vmatprep.subr.bf16.mxu0 0
    %1561 = vmatpush1.bf16.msra.mxu0 %v1412
    %1562 = vmatprep.subr.bf16.mxu0 0
    %1563 = vmatpush1.bf16.msra.mxu0 %v1409
    %1564 = vmatprep.subr.bf16.mxu0 0
    %1565 = vmatpush2.bf16.msra.mxu0 0
    %1566 = vmatprep.subr.bf16.mxu0 0
    %1567 = vmatpush2.bf16.msra.mxu0 0
    %1568 = vmatprep.subr.bf16.mxu0 0
    %1569 = vmatpush2.bf16.msra.mxu0 0
    %1570 = vmatprep.subr.bf16.mxu0 0
    %1571 = vmatpush2.bf16.msra.mxu0 0
    %1572 = vmatprep.subr.bf16.mxu0 0
    %1573 = vmatpush2.bf16.msra.mxu0 0
    %1574 = vmatprep.subr.bf16.mxu0 0
    %1575 = vmatpush2.bf16.msra.mxu0 0
    %1576 = vmatprep.subr.bf16.mxu0 0
    %1577 = vmatpush2.bf16.msra.mxu0 0
    %1578 = vmatprep.subr.bf16.mxu0 0
    %1579 = vmatpush2.bf16.msra.mxu0 0
    %1580 = vmatprep.mubr.bf16.mxu0 0
    %1581 = vmatmul.mubr.bf16.gmra.mxu0 %v159
    %v1582 = vpop.f32.mrf.mxu0
    %v1583 = vadd.f32 0.0, %v1582
    %v1584 = vpop.f32.mrf.mxu0
    %v1585 = vpop.f32.mrf.mxu0
    %v1586 = vadd.f32 0.0, %v1585
    %v1587 = vpop.f32.mrf.mxu0
    %1588 = vmatprep.mubr.bf16.mxu0 0
    %1589 = vmatmul.mubr.bf16.gmra.mxu0 %v160
    %v1590 = vpop.f32.mrf.mxu0
    %v1591 = vadd.f32 0.0, %v1590
    %v1592 = vpop.f32.mrf.mxu0
    %v1593 = vpop.f32.mrf.mxu0
    %v1594 = vadd.f32 0.0, %v1593
    %v1595 = vpop.f32.mrf.mxu0
    %1596 = vmatprep.mubr.bf16.mxu0 0
    %1597 = vmatmul.mubr.bf16.gmra.mxu0 %v161
    %v1598 = vpop.f32.mrf.mxu0
    %v1599 = vadd.f32 0.0, %v1598
    %v1600 = vpop.f32.mrf.mxu0
    %v1601 = vpop.f32.mrf.mxu0
    %v1602 = vadd.f32 0.0, %v1601
    %v1603 = vpop.f32.mrf.mxu0
    %1604 = vmatprep.mubr.bf16.mxu0 0
    %1605 = vmatmul.mubr.bf16.gmra.mxu0 %v162
    %v1606 = vpop.f32.mrf.mxu0
    %v1607 = vadd.f32 0.0, %v1606
    %v1608 = vpop.f32.mrf.mxu0
    %v1609 = vpop.f32.mrf.mxu0
    %v1610 = vadd.f32 0.0, %v1609
    %v1611 = vpop.f32.mrf.mxu0
    %1612 = vmatprep.mubr.bf16.mxu0 0
    %1613 = vmatmul.mubr.bf16.gmra.mxu0 %v163
    %v1614 = vpop.f32.mrf.mxu0
    %v1615 = vadd.f32 0.0, %v1614
    %v1616 = vpop.f32.mrf.mxu0
    %v1617 = vpop.f32.mrf.mxu0
    %v1618 = vadd.f32 0.0, %v1617
    %v1619 = vpop.f32.mrf.mxu0
    %1620 = vmatprep.mubr.bf16.mxu0 0
    %1621 = vmatmul.mubr.bf16.gmra.mxu0 %v164
    %v1622 = vpop.f32.mrf.mxu0
    %v1623 = vadd.f32 0.0, %v1622
    %v1624 = vpop.f32.mrf.mxu0
    %v1625 = vpop.f32.mrf.mxu0
    %v1626 = vadd.f32 0.0, %v1625
    %v1627 = vpop.f32.mrf.mxu0
    %1628 = vdwg.mxu0
    %v1629 = vrot.slane %v1490, 3
    %v1630 = vrot.slane %v1492, 3
    %v1631 = vrot.slane %v1583, 3
    %v1632 = vrot.slane %v1494, 3
    %v1633 = vrot.slane %v1496, 3
    %v1634 = vrot.slane %v1586, 3
    %v1635 = vrot.slane %v1500, 3
    %v1636 = vrot.slane %v1502, 3
    %v1637 = vrot.slane %v1591, 3
    %v1638 = vrot.slane %v1504, 3
    %v1639 = vrot.slane %v1506, 3
    %v1640 = vrot.slane %v1594, 3
    %v1641 = vrot.slane %v1510, 3
    %v1642 = vrot.slane %v1512, 3
    %v1643 = vrot.slane %v1599, 3
    %v1644 = vrot.slane %v1514, 3
    %v1645 = vrot.slane %v1516, 3
    %v1646 = vrot.slane %v1602, 3
    %v1647 = vrot.slane %v1520, 3
    %v1648 = vrot.slane %v1522, 3
    %v1649 = vrot.slane %v1607, 3
    %v1650 = vrot.slane %v1524, 3
    %v1651 = vrot.slane %v1526, 3
    %v1652 = vrot.slane %v1610, 3
    %v1653 = vrot.slane %v1530, 3
    %v1654 = vrot.slane %v1532, 3
    %v1655 = vrot.slane %v1615, 3
    %v1656 = vrot.slane %v1534, 3
    %v1657 = vrot.slane %v1536, 3
    %v1658 = vrot.slane %v1618, 3
    %v1659 = vrot.slane %v1540, 3
    %v1660 = vrot.slane %v1542, 3
    %v1661 = vrot.slane %v1623, 3
    %v1662 = vrot.slane %v1544, 3
    %v1663 = vrot.slane %v1546, 3
    %v1664 = vrot.slane %v1626, 3
    %vm1665 = vcmp.lt.s32.totalorder %v510, 5
    %v1666 = vsel %vm1665, %v1659, %v1662
    %v1667 = vsel %vm1665, %v1660, %v1663
    %v1668 = vsel %vm1665, %v1661, %v1664
    %v1669 = vsel %vm1665, %v1656, %v1659
    %v1670 = vsel %vm1665, %v1657, %v1660
    %v1671 = vsel %vm1665, %v1658, %v1661
    %v1672 = vsel %vm1665, %v1653, %v1656
    %v1673 = vsel %vm1665, %v1654, %v1657
    %v1674 = vsel %vm1665, %v1655, %v1658
    %v1675 = vsel %vm1665, %v1650, %v1653
    %v1676 = vsel %vm1665, %v1651, %v1654
    %v1677 = vsel %vm1665, %v1652, %v1655
    %v1678 = vsel %vm1665, %v1647, %v1650
    %v1679 = vsel %vm1665, %v1648, %v1651
    %v1680 = vsel %vm1665, %v1649, %v1652
    %v1681 = vsel %vm1665, %v1644, %v1647
    %v1682 = vsel %vm1665, %v1645, %v1648
    %v1683 = vsel %vm1665, %v1646, %v1649
    %v1684 = vsel %vm1665, %v1641, %v1644
    %v1685 = vsel %vm1665, %v1642, %v1645
    %v1686 = vsel %vm1665, %v1643, %v1646
    %v1687 = vsel %vm1665, %v1638, %v1641
    %v1688 = vsel %vm1665, %v1639, %v1642
    %v1689 = vsel %vm1665, %v1640, %v1643
    %v1690 = vsel %vm1665, %v1635, %v1638
    %v1691 = vsel %vm1665, %v1636, %v1639
    %v1692 = vsel %vm1665, %v1637, %v1640
    %v1693 = vsel %vm1665, %v1632, %v1635
    %v1694 = vsel %vm1665, %v1633, %v1636
    %v1695 = vsel %vm1665, %v1634, %v1637
    %v1696 = vsel %vm1665, %v1629, %v1632
    %v1697 = vsel %vm1665, %v1630, %v1633
    %v1698 = vsel %vm1665, %v1631, %v1634
    %v1699 = vsel %vm1665, %v1662, %v1629
    %v1700 = vsel %vm1665, %v1663, %v1630
    %v1701 = vsel %vm1665, %v1664, %v1631
    %v1702 = vadd.f32 %v1258, %v1696
    %v1703 = vadd.f32 %v1259, %v1697
    %v1704 = vadd.f32 %v1260, %v1698
    %v1705 = vadd.f32 %v1261, %v1693
    %v1706 = vadd.f32 %v1262, %v1694
    %v1707 = vadd.f32 %v1263, %v1695
    %v1708 = vadd.f32 %v1264, %v1690
    %v1709 = vadd.f32 %v1265, %v1691
    %v1710 = vadd.f32 %v1266, %v1692
    %v1711 = vadd.f32 %v1267, %v1687
    %v1712 = vadd.f32 %v1268, %v1688
    %v1713 = vadd.f32 %v1269, %v1689
    %v1714 = vadd.f32 %v1270, %v1684
    %v1715 = vadd.f32 %v1271, %v1685
    %v1716 = vadd.f32 %v1272, %v1686
    %v1717 = vadd.f32 %v1273, %v1681
    %v1718 = vadd.f32 %v1274, %v1682
    %v1719 = vadd.f32 %v1275, %v1683
    %v1720 = vadd.f32 %v1276, %v1678
    %v1721 = vadd.f32 %v1277, %v1679
    %v1722 = vadd.f32 %v1278, %v1680
    %v1723 = vadd.f32 %v1279, %v1675
    %v1724 = vadd.f32 %v1280, %v1676
    %v1725 = vadd.f32 %v1281, %v1677
    %v1726 = vadd.f32 %v1282, %v1672
    %v1727 = vadd.f32 %v1283, %v1673
    %v1728 = vadd.f32 %v1284, %v1674
    %v1729 = vadd.f32 %v1285, %v1669
    %v1730 = vadd.f32 %v1286, %v1670
    %v1731 = vadd.f32 %v1287, %v1671
    %v1732 = vadd.f32 %v1288, %v1666
    %v1733 = vadd.f32 %v1289, %v1667
    %v1734 = vadd.f32 %v1290, %v1668
    %v1735 = vadd.f32 %v1291, %v1699
    %v1736 = vadd.f32 %v1292, %v1700
    %v1737 = vadd.f32 %v1293, %v1701
    %s1738 = scalar_lea.vmem [#allocation5], 768
    %v1739 = vld [vmem:[%s1738] sm:$0xff]
    %v1740 = vld [vmem:[%s1738 + $0x8] sm:$0xf]
    %v1741 = vld [vmem:[%s1738 + $0xc] sm:$0xff]
    %v1742 = vld [vmem:[%s1738 + $0x14] sm:$0xf]
    %v1743 = vld [vmem:[%s1738 + $0x18] sm:$0xff]
    %v1744 = vld [vmem:[%s1738 + $0x20] sm:$0xf]
    %v1745 = vld [vmem:[%s1738 + $0x24] sm:$0xff]
    %v1746 = vld [vmem:[%s1738 + $0x2c] sm:$0xf]
    %v1747 = vld [vmem:[%s1738 + $0x30] sm:$0xff]
    %v1748 = vld [vmem:[%s1738 + $0x38] sm:$0xf]
    %v1749 = vld [vmem:[%s1738 + $0x3c] sm:$0xff]
    %v1750 = vld [vmem:[%s1738 + $0x44] sm:$0xf]
    %v1751 = vld [vmem:[%s1738 + $0x48] sm:$0xff]
    %v1752 = vld [vmem:[%s1738 + $0x50] sm:$0xf]
    %v1753 = vld [vmem:[%s1738 + $0x54] sm:$0xff]
    %v1754 = vld [vmem:[%s1738 + $0x5c] sm:$0xf]
    %v1755 = vld [vmem:[%s1738 + $0x60] sm:$0xff]
    %v1756 = vld [vmem:[%s1738 + $0x68] sm:$0xf]
    %v1757 = vld [vmem:[%s1738 + $0x6c] sm:$0xff]
    %v1758 = vld [vmem:[%s1738 + $0x74] sm:$0xf]
    %v1759 = vld [vmem:[%s1738 + $0x78] sm:$0xff]
    %v1760 = vld [vmem:[%s1738 + $0x80] sm:$0xf]
    %v1761 = vld [vmem:[%s1738 + $0x84] sm:$0xff]
    %v1762 = vld [vmem:[%s1738 + $0x8c] sm:$0xf]
    %v1763 = vld [vmem:[%s1738 + $0x90] sm:$0xff]
    %v1764 = vld [vmem:[%s1738 + $0x98] sm:$0xf]
    %v1765 = vld [vmem:[%s1738 + $0x9c] sm:$0xff]
    %v1766 = vld [vmem:[%s1738 + $0xa4] sm:$0xf]
    %v1767 = vld [vmem:[%s1738 + $0xa8] sm:$0xff]
    %v1768 = vld [vmem:[%s1738 + $0xb0] sm:$0xf]
    %v1769 = vld [vmem:[%s1738 + $0xb4] sm:$0xff]
    %v1770 = vld [vmem:[%s1738 + $0xbc] sm:$0xf]
    %v1803 = vunpack.c.l.b16 %v1739
    %v1804 = vunpack.c.h.b16 %v1739
    %v1805 = vunpack.c.l.b16 %v1740
    %v1806 = vunpack.c.l.b16 %v1741
    %v1807 = vunpack.c.h.b16 %v1741
    %v1808 = vunpack.c.l.b16 %v1742
    %v1809 = vunpack.c.l.b16 %v1743
    %v1810 = vunpack.c.h.b16 %v1743
    %v1811 = vunpack.c.l.b16 %v1744
    %v1812 = vunpack.c.l.b16 %v1745
    %v1813 = vunpack.c.h.b16 %v1745
    %v1814 = vunpack.c.l.b16 %v1746
    %v1815 = vunpack.c.l.b16 %v1747
    %v1816 = vunpack.c.h.b16 %v1747
    %v1817 = vunpack.c.l.b16 %v1748
    %v1818 = vunpack.c.l.b16 %v1749
    %v1819 = vunpack.c.h.b16 %v1749
    %v1820 = vunpack.c.l.b16 %v1750
    %v1821 = vunpack.c.l.b16 %v1751
    %v1822 = vunpack.c.h.b16 %v1751
    %v1823 = vunpack.c.l.b16 %v1752
    %v1824 = vunpack.c.l.b16 %v1753
    %v1825 = vunpack.c.h.b16 %v1753
    %v1826 = vunpack.c.l.b16 %v1754
    %v1827 = vunpack.c.l.b16 %v1755
    %v1828 = vunpack.c.h.b16 %v1755
    %v1829 = vunpack.c.l.b16 %v1756
    %v1830 = vunpack.c.l.b16 %v1757
    %v1831 = vunpack.c.h.b16 %v1757
    %v1832 = vunpack.c.l.b16 %v1758
    %v1833 = vunpack.c.l.b16 %v1759
    %v1834 = vunpack.c.h.b16 %v1759
    %v1835 = vunpack.c.l.b16 %v1760
    %v1836 = vunpack.c.l.b16 %v1761
    %v1837 = vunpack.c.h.b16 %v1761
    %v1838 = vunpack.c.l.b16 %v1762
    %v1839 = vunpack.c.l.b16 %v1763
    %v1840 = vunpack.c.h.b16 %v1763
    %v1841 = vunpack.c.l.b16 %v1764
    %v1842 = vunpack.c.l.b16 %v1765
    %v1843 = vunpack.c.h.b16 %v1765
    %v1844 = vunpack.c.l.b16 %v1766
    %v1845 = vunpack.c.l.b16 %v1767
    %v1846 = vunpack.c.h.b16 %v1767
    %v1847 = vunpack.c.l.b16 %v1768
    %v1848 = vunpack.c.l.b16 %v1769
    %v1849 = vunpack.c.h.b16 %v1769
    %v1850 = vunpack.c.l.b16 %v1770
    %v1851 = vpack.c.b16 %v1806, %v1803
    %v1852 = vpack.c.b16 %v1807, %v1804
    %v1853 = vpack.c.b16 %v1808, %v1805
    %v1854 = vpack.c.b16 %v1812, %v1809
    %v1855 = vpack.c.b16 %v1813, %v1810
    %v1856 = vpack.c.b16 %v1814, %v1811
    %v1857 = vpack.c.b16 %v1818, %v1815
    %v1858 = vpack.c.b16 %v1819, %v1816
    %v1859 = vpack.c.b16 %v1820, %v1817
    %v1860 = vpack.c.b16 %v1824, %v1821
    %v1861 = vpack.c.b16 %v1825, %v1822
    %v1862 = vpack.c.b16 %v1826, %v1823
    %v1863 = vpack.c.b16 %v1830, %v1827
    %v1864 = vpack.c.b16 %v1831, %v1828
    %v1865 = vpack.c.b16 %v1832, %v1829
    %v1866 = vpack.c.b16 %v1836, %v1833
    %v1867 = vpack.c.b16 %v1837, %v1834
    %v1868 = vpack.c.b16 %v1838, %v1835
    %v1869 = vpack.c.b16 %v1842, %v1839
    %v1870 = vpack.c.b16 %v1843, %v1840
    %v1871 = vpack.c.b16 %v1844, %v1841
    %v1872 = vpack.c.b16 %v1848, %v1845
    %v1873 = vpack.c.b16 %v1849, %v1846
    %v1874 = vpack.c.b16 %v1850, %v1847
    %1899 = vmatprep.subr.bf16.mxu0 %v1873
    %1900 = vmatpush1.bf16.msra.mxu0 %v1872
    %1901 = vmatprep.subr.bf16.mxu0 %v1870
    %1902 = vmatpush1.bf16.msra.mxu0 %v1869
    %1903 = vmatprep.subr.bf16.mxu0 %v1867
    %1904 = vmatpush1.bf16.msra.mxu0 %v1866
    %1905 = vmatprep.subr.bf16.mxu0 %v1864
    %1906 = vmatpush1.bf16.msra.mxu0 %v1863
    %1907 = vmatprep.subr.bf16.mxu0 %v1861
    %1908 = vmatpush1.bf16.msra.mxu0 %v1860
    %1909 = vmatprep.subr.bf16.mxu0 %v1858
    %1910 = vmatpush1.bf16.msra.mxu0 %v1857
    %1911 = vmatprep.subr.bf16.mxu0 %v1855
    %1912 = vmatpush1.bf16.msra.mxu0 %v1854
    %1913 = vmatprep.subr.bf16.mxu0 %v1852
    %1914 = vmatpush1.bf16.msra.mxu0 %v1851
    %1915 = vmatprep.subr.bf16.mxu0 0
    %1916 = vmatpush2.bf16.msra.mxu0 0
    %1917 = vmatprep.subr.bf16.mxu0 0
    %1918 = vmatpush2.bf16.msra.mxu0 0
    %1919 = vmatprep.subr.bf16.mxu0 0
    %1920 = vmatpush2.bf16.msra.mxu0 0
    %1921 = vmatprep.subr.bf16.mxu0 0
    %1922 = vmatpush2.bf16.msra.mxu0 0
    %1923 = vmatprep.subr.bf16.mxu0 0
    %1924 = vmatpush2.bf16.msra.mxu0 0
    %1925 = vmatprep.subr.bf16.mxu0 0
    %1926 = vmatpush2.bf16.msra.mxu0 0
    %1927 = vmatprep.subr.bf16.mxu0 0
    %1928 = vmatpush2.bf16.msra.mxu0 0
    %1929 = vmatprep.subr.bf16.mxu0 0
    %1930 = vmatpush2.bf16.msra.mxu0 0
    %1931 = vmatprep.mubr.bf16.mxu0 0
    %1932 = vmatmul.mubr.bf16.gmra.mxu0 %v159
    %v1933 = vpop.f32.mrf.mxu0
    %v1934 = vadd.f32 0.0, %v1933
    %v1935 = vpop.f32.mrf.mxu0
    %v1936 = vadd.f32 0.0, %v1935
    %v1937 = vpop.f32.mrf.mxu0
    %v1938 = vadd.f32 0.0, %v1937
    %v1939 = vpop.f32.mrf.mxu0
    %v1940 = vadd.f32 0.0, %v1939
    %1941 = vmatprep.mubr.bf16.mxu0 0
    %1942 = vmatmul.mubr.bf16.gmra.mxu0 %v160
    %v1943 = vpop.f32.mrf.mxu0
    %v1944 = vadd.f32 0.0, %v1943
    %v1945 = vpop.f32.mrf.mxu0
    %v1946 = vadd.f32 0.0, %v1945
    %v1947 = vpop.f32.mrf.mxu0
    %v1948 = vadd.f32 0.0, %v1947
    %v1949 = vpop.f32.mrf.mxu0
    %v1950 = vadd.f32 0.0, %v1949
    %1951 = vmatprep.mubr.bf16.mxu0 0
    %1952 = vmatmul.mubr.bf16.gmra.mxu0 %v161
    %v1953 = vpop.f32.mrf.mxu0
    %v1954 = vadd.f32 0.0, %v1953
    %v1955 = vpop.f32.mrf.mxu0
    %v1956 = vadd.f32 0.0, %v1955
    %v1957 = vpop.f32.mrf.mxu0
    %v1958 = vadd.f32 0.0, %v1957
    %v1959 = vpop.f32.mrf.mxu0
    %v1960 = vadd.f32 0.0, %v1959
    %1961 = vmatprep.mubr.bf16.mxu0 0
    %1962 = vmatmul.mubr.bf16.gmra.mxu0 %v162
    %v1963 = vpop.f32.mrf.mxu0
    %v1964 = vadd.f32 0.0, %v1963
    %v1965 = vpop.f32.mrf.mxu0
    %v1966 = vadd.f32 0.0, %v1965
    %v1967 = vpop.f32.mrf.mxu0
    %v1968 = vadd.f32 0.0, %v1967
    %v1969 = vpop.f32.mrf.mxu0
    %v1970 = vadd.f32 0.0, %v1969
    %1971 = vmatprep.mubr.bf16.mxu0 0
    %1972 = vmatmul.mubr.bf16.gmra.mxu0 %v163
    %v1973 = vpop.f32.mrf.mxu0
    %v1974 = vadd.f32 0.0, %v1973
    %v1975 = vpop.f32.mrf.mxu0
    %v1976 = vadd.f32 0.0, %v1975
    %v1977 = vpop.f32.mrf.mxu0
    %v1978 = vadd.f32 0.0, %v1977
    %v1979 = vpop.f32.mrf.mxu0
    %v1980 = vadd.f32 0.0, %v1979
    %1981 = vmatprep.mubr.bf16.mxu0 0
    %1982 = vmatmul.mubr.bf16.gmra.mxu0 %v164
    %v1983 = vpop.f32.mrf.mxu0
    %v1984 = vadd.f32 0.0, %v1983
    %v1985 = vpop.f32.mrf.mxu0
    %v1986 = vadd.f32 0.0, %v1985
    %v1987 = vpop.f32.mrf.mxu0
    %v1988 = vadd.f32 0.0, %v1987
    %v1989 = vpop.f32.mrf.mxu0
    %v1990 = vadd.f32 0.0, %v1989
    %1991 = vdwg.mxu0
    %1992 = vmatprep.subr.bf16.mxu0 0
    %1993 = vmatpush1.bf16.msra.mxu0 %v1874
    %1994 = vmatprep.subr.bf16.mxu0 0
    %1995 = vmatpush1.bf16.msra.mxu0 %v1871
    %1996 = vmatprep.subr.bf16.mxu0 0
    %1997 = vmatpush1.bf16.msra.mxu0 %v1868
    %1998 = vmatprep.subr.bf16.mxu0 0
    %1999 = vmatpush1.bf16.msra.mxu0 %v1865
    %2000 = vmatprep.subr.bf16.mxu0 0
    %2001 = vmatpush1.bf16.msra.mxu0 %v1862
    %2002 = vmatprep.subr.bf16.mxu0 0
    %2003 = vmatpush1.bf16.msra.mxu0 %v1859
    %2004 = vmatprep.subr.bf16.mxu0 0
    %2005 = vmatpush1.bf16.msra.mxu0 %v1856
    %2006 = vmatprep.subr.bf16.mxu0 0
    %2007 = vmatpush1.bf16.msra.mxu0 %v1853
    %2008 = vmatprep.subr.bf16.mxu0 0
    %2009 = vmatpush2.bf16.msra.mxu0 0
    %2010 = vmatprep.subr.bf16.mxu0 0
    %2011 = vmatpush2.bf16.msra.mxu0 0
    %2012 = vmatprep.subr.bf16.mxu0 0
    %2013 = vmatpush2.bf16.msra.mxu0 0
    %2014 = vmatprep.subr.bf16.mxu0 0
    %2015 = vmatpush2.bf16.msra.mxu0 0
    %2016 = vmatprep.subr.bf16.mxu0 0
    %2017 = vmatpush2.bf16.msra.mxu0 0
    %2018 = vmatprep.subr.bf16.mxu0 0
    %2019 = vmatpush2.bf16.msra.mxu0 0
    %2020 = vmatprep.subr.bf16.mxu0 0
    %2021 = vmatpush2.bf16.msra.mxu0 0
    %2022 = vmatprep.subr.bf16.mxu0 0
    %2023 = vmatpush2.bf16.msra.mxu0 0
    %2024 = vmatprep.mubr.bf16.mxu0 0
    %2025 = vmatmul.mubr.bf16.gmra.mxu0 %v159
    %v2026 = vpop.f32.mrf.mxu0
    %v2027 = vadd.f32 0.0, %v2026
    %v2028 = vpop.f32.mrf.mxu0
    %v2029 = vpop.f32.mrf.mxu0
    %v2030 = vadd.f32 0.0, %v2029
    %v2031 = vpop.f32.mrf.mxu0
    %2032 = vmatprep.mubr.bf16.mxu0 0
    %2033 = vmatmul.mubr.bf16.gmra.mxu0 %v160
    %v2034 = vpop.f32.mrf.mxu0
    %v2035 = vadd.f32 0.0, %v2034
    %v2036 = vpop.f32.mrf.mxu0
    %v2037 = vpop.f32.mrf.mxu0
    %v2038 = vadd.f32 0.0, %v2037
    %v2039 = vpop.f32.mrf.mxu0
    %2040 = vmatprep.mubr.bf16.mxu0 0
    %2041 = vmatmul.mubr.bf16.gmra.mxu0 %v161
    %v2042 = vpop.f32.mrf.mxu0
    %v2043 = vadd.f32 0.0, %v2042
    %v2044 = vpop.f32.mrf.mxu0
    %v2045 = vpop.f32.mrf.mxu0
    %v2046 = vadd.f32 0.0, %v2045
    %v2047 = vpop.f32.mrf.mxu0
    %2048 = vmatprep.mubr.bf16.mxu0 0
    %2049 = vmatmul.mubr.bf16.gmra.mxu0 %v162
    %v2050 = vpop.f32.mrf.mxu0
    %v2051 = vadd.f32 0.0, %v2050
    %v2052 = vpop.f32.mrf.mxu0
    %v2053 = vpop.f32.mrf.mxu0
    %v2054 = vadd.f32 0.0, %v2053
    %v2055 = vpop.f32.mrf.mxu0
    %2056 = vmatprep.mubr.bf16.mxu0 0
    %2057 = vmatmul.mubr.bf16.gmra.mxu0 %v163
    %v2058 = vpop.f32.mrf.mxu0
    %v2059 = vadd.f32 0.0, %v2058
    %v2060 = vpop.f32.mrf.mxu0
    %v2061 = vpop.f32.mrf.mxu0
    %v2062 = vadd.f32 0.0, %v2061
    %v2063 = vpop.f32.mrf.mxu0
    %2064 = vmatprep.mubr.bf16.mxu0 0
    %2065 = vmatmul.mubr.bf16.gmra.mxu0 %v164
    %v2066 = vpop.f32.mrf.mxu0
    %v2067 = vadd.f32 0.0, %v2066
    %v2068 = vpop.f32.mrf.mxu0
    %v2069 = vpop.f32.mrf.mxu0
    %v2070 = vadd.f32 0.0, %v2069
    %v2071 = vpop.f32.mrf.mxu0
    %2072 = vdwg.mxu0
    %v2073 = vrot.slane %v1934, 4
    %v2074 = vrot.slane %v1936, 4
    %v2075 = vrot.slane %v2027, 4
    %v2076 = vrot.slane %v1938, 4
    %v2077 = vrot.slane %v1940, 4
    %v2078 = vrot.slane %v2030, 4
    %v2079 = vrot.slane %v1944, 4
    %v2080 = vrot.slane %v1946, 4
    %v2081 = vrot.slane %v2035, 4
    %v2082 = vrot.slane %v1948, 4
    %v2083 = vrot.slane %v1950, 4
    %v2084 = vrot.slane %v2038, 4
    %v2085 = vrot.slane %v1954, 4
    %v2086 = vrot.slane %v1956, 4
    %v2087 = vrot.slane %v2043, 4
    %v2088 = vrot.slane %v1958, 4
    %v2089 = vrot.slane %v1960, 4
    %v2090 = vrot.slane %v2046, 4
    %v2091 = vrot.slane %v1964, 4
    %v2092 = vrot.slane %v1966, 4
    %v2093 = vrot.slane %v2051, 4
    %v2094 = vrot.slane %v1968, 4
    %v2095 = vrot.slane %v1970, 4
    %v2096 = vrot.slane %v2054, 4
    %v2097 = vrot.slane %v1974, 4
    %v2098 = vrot.slane %v1976, 4
    %v2099 = vrot.slane %v2059, 4
    %v2100 = vrot.slane %v1978, 4
    %v2101 = vrot.slane %v1980, 4
    %v2102 = vrot.slane %v2062, 4
    %v2103 = vrot.slane %v1984, 4
    %v2104 = vrot.slane %v1986, 4
    %v2105 = vrot.slane %v2067, 4
    %v2106 = vrot.slane %v1988, 4
    %v2107 = vrot.slane %v1990, 4
    %v2108 = vrot.slane %v2070, 4
    %vm2109 = vcmp.lt.s32.totalorder %v510, 4
    %v2110 = vsel %vm2109, %v2103, %v2106
    %v2111 = vsel %vm2109, %v2104, %v2107
    %v2112 = vsel %vm2109, %v2105, %v2108
    %v2113 = vsel %vm2109, %v2100, %v2103
    %v2114 = vsel %vm2109, %v2101, %v2104
    %v2115 = vsel %vm2109, %v2102, %v2105
    %v2116 = vsel %vm2109, %v2097, %v2100
    %v2117 = vsel %vm2109, %v2098, %v2101
    %v2118 = vsel %vm2109, %v2099, %v2102
    %v2119 = vsel %vm2109, %v2094, %v2097
    %v2120 = vsel %vm2109, %v2095, %v2098
    %v2121 = vsel %vm2109, %v2096, %v2099
    %v2122 = vsel %vm2109, %v2091, %v2094
    %v2123 = vsel %vm2109, %v2092, %v2095
    %v2124 = vsel %vm2109, %v2093, %v2096
    %v2125 = vsel %vm2109, %v2088, %v2091
    %v2126 = vsel %vm2109, %v2089, %v2092
    %v2127 = vsel %vm2109, %v2090, %v2093
    %v2128 = vsel %vm2109, %v2085, %v2088
    %v2129 = vsel %vm2109, %v2086, %v2089
    %v2130 = vsel %vm2109, %v2087, %v2090
    %v2131 = vsel %vm2109, %v2082, %v2085
    %v2132 = vsel %vm2109, %v2083, %v2086
    %v2133 = vsel %vm2109, %v2084, %v2087
    %v2134 = vsel %vm2109, %v2079, %v2082
    %v2135 = vsel %vm2109, %v2080, %v2083
    %v2136 = vsel %vm2109, %v2081, %v2084
    %v2137 = vsel %vm2109, %v2076, %v2079
    %v2138 = vsel %vm2109, %v2077, %v2080
    %v2139 = vsel %vm2109, %v2078, %v2081
    %v2140 = vsel %vm2109, %v2073, %v2076
    %v2141 = vsel %vm2109, %v2074, %v2077
    %v2142 = vsel %vm2109, %v2075, %v2078
    %v2143 = vsel %vm2109, %v2106, %v2073
    %v2144 = vsel %vm2109, %v2107, %v2074
    %v2145 = vsel %vm2109, %v2108, %v2075
    %v2146 = vadd.f32 %v1702, %v2140
    %v2147 = vadd.f32 %v1703, %v2141
    %v2148 = vadd.f32 %v1704, %v2142
    %v2149 = vadd.f32 %v1705, %v2137
    %v2150 = vadd.f32 %v1706, %v2138
    %v2151 = vadd.f32 %v1707, %v2139
    %v2152 = vadd.f32 %v1708, %v2134
    %v2153 = vadd.f32 %v1709, %v2135
    %v2154 = vadd.f32 %v1710, %v2136
    %v2155 = vadd.f32 %v1711, %v2131
    %v2156 = vadd.f32 %v1712, %v2132
    %v2157 = vadd.f32 %v1713, %v2133
    %v2158 = vadd.f32 %v1714, %v2128
    %v2159 = vadd.f32 %v1715, %v2129
    %v2160 = vadd.f32 %v1716, %v2130
    %v2161 = vadd.f32 %v1717, %v2125
    %v2162 = vadd.f32 %v1718, %v2126
    %v2163 = vadd.f32 %v1719, %v2127
    %v2164 = vadd.f32 %v1720, %v2122
    %v2165 = vadd.f32 %v1721, %v2123
    %v2166 = vadd.f32 %v1722, %v2124
    %v2167 = vadd.f32 %v1723, %v2119
    %v2168 = vadd.f32 %v1724, %v2120
    %v2169 = vadd.f32 %v1725, %v2121
    %v2170 = vadd.f32 %v1726, %v2116
    %v2171 = vadd.f32 %v1727, %v2117
    %v2172 = vadd.f32 %v1728, %v2118
    %v2173 = vadd.f32 %v1729, %v2113
    %v2174 = vadd.f32 %v1730, %v2114
    %v2175 = vadd.f32 %v1731, %v2115
    %v2176 = vadd.f32 %v1732, %v2110
    %v2177 = vadd.f32 %v1733, %v2111
    %v2178 = vadd.f32 %v1734, %v2112
    %v2179 = vadd.f32 %v1735, %v2143
    %v2180 = vadd.f32 %v1736, %v2144
    %v2181 = vadd.f32 %v1737, %v2145
    %v2182 = vadd.s32 %v510, 8
    %v2183 = vadd.s32 %v510, 16
    %v2184 = vld [vmem:[#allocation7] sm:$0x7]
    %v2185 = vlaneseq
    %v2186 = vshrl.u32 %v2185, 7
    %v2187 = vsub.s32 0, %v2186
    %v2188 = vrot.slane %v2184, %v2187
    %v2189 = vlaneseq
    %v2190 = vshrl.u32 %v2189, 7
    %v2191 = vsub.s32 1, %v2190
    %v2192 = vrot.slane %v2184, %v2191
    %v2193 = vlaneseq
    %v2194 = vshrl.u32 %v2193, 7
    %v2195 = vsub.s32 2, %v2194
    %v2196 = vrot.slane %v2184, %v2195
    %vm2197 = vcmp.lt.s32.totalorder %v510, %v2188
    %vm2198 = vcmp.lt.s32.totalorder %v510, %v2192
    %vm2199 = vcmp.lt.s32.totalorder %v510, %v2196
    %vm2200 = vcmp.lt.s32.totalorder %v2182, %v2188
    %vm2201 = vcmp.lt.s32.totalorder %v2182, %v2192
    %vm2202 = vcmp.lt.s32.totalorder %v2182, %v2196
    %vm2203 = vcmp.lt.s32.totalorder %v2183, %v2188
    %vm2204 = vcmp.lt.s32.totalorder %v2183, %v2192
    %vm2205 = vcmp.lt.s32.totalorder %v2183, %v2196
    %v2206 = vsel %vm2197, %v2146, -inf
    %v2207 = vsel %vm2198, %v2147, -inf
    %v2208 = vsel %vm2199, %v2148, -inf
    %v2209 = vsel %vm2200, %v2149, -inf
    %v2210 = vsel %vm2201, %v2150, -inf
    %v2211 = vsel %vm2202, %v2151, -inf
    %v2212 = vsel %vm2203, %v2152, -inf
    %v2213 = vsel %vm2204, %v2153, -inf
    %v2214 = vsel %vm2205, %v2154, -inf
    %v2215 = vsel %vm2197, %v2155, -inf
    %v2216 = vsel %vm2198, %v2156, -inf
    %v2217 = vsel %vm2199, %v2157, -inf
    %v2218 = vsel %vm2200, %v2158, -inf
    %v2219 = vsel %vm2201, %v2159, -inf
    %v2220 = vsel %vm2202, %v2160, -inf
    %v2221 = vsel %vm2203, %v2161, -inf
    %v2222 = vsel %vm2204, %v2162, -inf
    %v2223 = vsel %vm2205, %v2163, -inf
    %v2224 = vsel %vm2197, %v2164, -inf
    %v2225 = vsel %vm2198, %v2165, -inf
    %v2226 = vsel %vm2199, %v2166, -inf
    %v2227 = vsel %vm2200, %v2167, -inf
    %v2228 = vsel %vm2201, %v2168, -inf
    %v2229 = vsel %vm2202, %v2169, -inf
    %v2230 = vsel %vm2203, %v2170, -inf
    %v2231 = vsel %vm2204, %v2171, -inf
    %v2232 = vsel %vm2205, %v2172, -inf
    %v2233 = vsel %vm2197, %v2173, -inf
    %v2234 = vsel %vm2198, %v2174, -inf
    %v2235 = vsel %vm2199, %v2175, -inf
    %v2236 = vsel %vm2200, %v2176, -inf
    %v2237 = vsel %vm2201, %v2177, -inf
    %v2238 = vsel %vm2202, %v2178, -inf
    %v2239 = vsel %vm2203, %v2179, -inf
    %v2240 = vsel %vm2204, %v2180, -inf
    %v2241 = vsel %vm2205, %v2181, -inf
    %v2242 = vmax.f32 %v2206, %v2209
    %v2243 = vmax.f32 %v2242, %v2212
    %v2244 = vrot.slane %v2243, 4
    %v2245 = vmax.f32 %v2243, %v2244
    %v2246 = vrot.slane %v2245, 2
    %v2247 = vmax.f32 %v2245, %v2246
    %v2248 = vrot.slane %v2247, 1
    %v2249 = vmax.f32 %v2247, %v2248
    %v2250 = vmax.f32 %v2207, %v2210
    %v2251 = vmax.f32 %v2250, %v2213
    %v2252 = vrot.slane %v2251, 4
    %v2253 = vmax.f32 %v2251, %v2252
    %v2254 = vrot.slane %v2253, 2
    %v2255 = vmax.f32 %v2253, %v2254
    %v2256 = vrot.slane %v2255, 1
    %v2257 = vmax.f32 %v2255, %v2256
    %v2258 = vmax.f32 %v2208, %v2211
    %v2259 = vmax.f32 %v2258, %v2214
    %v2260 = vrot.slane %v2259, 4
    %v2261 = vmax.f32 %v2259, %v2260
    %v2262 = vrot.slane %v2261, 2
    %v2263 = vmax.f32 %v2261, %v2262
    %v2264 = vrot.slane %v2263, 1
    %v2265 = vmax.f32 %v2263, %v2264
    %v2266 = vmax.f32 %v2215, %v2218
    %v2267 = vmax.f32 %v2266, %v2221
    %v2268 = vrot.slane %v2267, 4
    %v2269 = vmax.f32 %v2267, %v2268
    %v2270 = vrot.slane %v2269, 2
    %v2271 = vmax.f32 %v2269, %v2270
    %v2272 = vrot.slane %v2271, 1
    %v2273 = vmax.f32 %v2271, %v2272
    %v2274 = vmax.f32 %v2216, %v2219
    %v2275 = vmax.f32 %v2274, %v2222
    %v2276 = vrot.slane %v2275, 4
    %v2277 = vmax.f32 %v2275, %v2276
    %v2278 = vrot.slane %v2277, 2
    %v2279 = vmax.f32 %v2277, %v2278
    %v2280 = vrot.slane %v2279, 1
    %v2281 = vmax.f32 %v2279, %v2280
    %v2282 = vmax.f32 %v2217, %v2220
    %v2283 = vmax.f32 %v2282, %v2223
    %v2284 = vrot.slane %v2283, 4
    %v2285 = vmax.f32 %v2283, %v2284
    %v2286 = vrot.slane %v2285, 2
    %v2287 = vmax.f32 %v2285, %v2286
    %v2288 = vrot.slane %v2287, 1
    %v2289 = vmax.f32 %v2287, %v2288
    %v2290 = vmax.f32 %v2224, %v2227
    %v2291 = vmax.f32 %v2290, %v2230
    %v2292 = vrot.slane %v2291, 4
    %v2293 = vmax.f32 %v2291, %v2292
    %v2294 = vrot.slane %v2293, 2
    %v2295 = vmax.f32 %v2293, %v2294
    %v2296 = vrot.slane %v2295, 1
    %v2297 = vmax.f32 %v2295, %v2296
    %v2298 = vmax.f32 %v2225, %v2228
    %v2299 = vmax.f32 %v2298, %v2231
    %v2300 = vrot.slane %v2299, 4
    %v2301 = vmax.f32 %v2299, %v2300
    %v2302 = vrot.slane %v2301, 2
    %v2303 = vmax.f32 %v2301, %v2302
    %v2304 = vrot.slane %v2303, 1
    %v2305 = vmax.f32 %v2303, %v2304
    %v2306 = vmax.f32 %v2226, %v2229
    %v2307 = vmax.f32 %v2306, %v2232
    %v2308 = vrot.slane %v2307, 4
    %v2309 = vmax.f32 %v2307, %v2308
    %v2310 = vrot.slane %v2309, 2
    %v2311 = vmax.f32 %v2309, %v2310
    %v2312 = vrot.slane %v2311, 1
    %v2313 = vmax.f32 %v2311, %v2312
    %v2314 = vmax.f32 %v2233, %v2236
    %v2315 = vmax.f32 %v2314, %v2239
    %v2316 = vrot.slane %v2315, 4
    %v2317 = vmax.f32 %v2315, %v2316
    %v2318 = vrot.slane %v2317, 2
    %v2319 = vmax.f32 %v2317, %v2318
    %v2320 = vrot.slane %v2319, 1
    %v2321 = vmax.f32 %v2319, %v2320
    %v2322 = vmax.f32 %v2234, %v2237
    %v2323 = vmax.f32 %v2322, %v2240
    %v2324 = vrot.slane %v2323, 4
    %v2325 = vmax.f32 %v2323, %v2324
    %v2326 = vrot.slane %v2325, 2
    %v2327 = vmax.f32 %v2325, %v2326
    %v2328 = vrot.slane %v2327, 1
    %v2329 = vmax.f32 %v2327, %v2328
    %v2330 = vmax.f32 %v2235, %v2238
    %v2331 = vmax.f32 %v2330, %v2241
    %v2332 = vrot.slane %v2331, 4
    %v2333 = vmax.f32 %v2331, %v2332
    %v2334 = vrot.slane %v2333, 2
    %v2335 = vmax.f32 %v2333, %v2334
    %v2336 = vrot.slane %v2335, 1
    %v2337 = vmax.f32 %v2335, %v2336
    %v2338 = vld [vmem:[%s2] sm:$0x7]
    %v2340 = vlaneseq
    %v2341 = vshrl.u32 %v2340, 7
    %v2342 = vsub.s32 0, %v2341
    %v2343 = vrot.slane %v2338, %v2342
    %v2344 = vlaneseq
    %v2345 = vshrl.u32 %v2344, 7
    %v2346 = vsub.s32 1, %v2345
    %v2347 = vrot.slane %v2338, %v2346
    %v2348 = vlaneseq
    %v2349 = vshrl.u32 %v2348, 7
    %v2350 = vsub.s32 2, %v2349
    %v2351 = vrot.slane %v2338, %v2350
    %v2355 = vadd.f32 %v2249, %v2343
    %v2356 = vadd.f32 %v2257, %v2347
    %v2357 = vadd.f32 %v2265, %v2351
    %v2358 = vadd.f32 %v2273, %v2343
    %v2359 = vadd.f32 %v2281, %v2347
    %v2360 = vadd.f32 %v2289, %v2351
    %v2361 = vadd.f32 %v2297, %v2343
    %v2362 = vadd.f32 %v2305, %v2347
    %v2363 = vadd.f32 %v2313, %v2351
    %v2364 = vadd.f32 %v2321, %v2343
    %v2365 = vadd.f32 %v2329, %v2347
    %v2366 = vadd.f32 %v2337, %v2351
    %v2367 = vtanh.pop %v2355
    %v2368 = vtanh.pop %v2356
    %v2369 = vtanh.pop %v2357
    %v2370 = vtanh.pop %v2358
    %v2371 = vtanh.pop %v2359
    %v2372 = vtanh.pop %v2360
    %v2373 = vtanh.pop %v2361
    %v2374 = vtanh.pop %v2362
    %v2375 = vtanh.pop %v2363
    %v2376 = vtanh.pop %v2364
    %v2377 = vtanh.pop %v2365
    %v2378 = vtanh.pop %v2366
    %v2391 = vcombine.low %v2367, %v2368
    %v2392 = vcombine.low %v2370, %v2371
    %v2393 = vcombine.low %v2373, %v2374
    %v2394 = vcombine.low %v2376, %v2377
    %v2395 = vrot.slane %v2392, 7
    %vm2396 = vcmask 1041409
    %v2397 = vsel %vm2396, %v2395, %v2391
    %vm2398 = vcmask 1045509
    %v2399 = vsel %vm2398, %v2395, %v2397
    %v2400 = vrot.slane %v2393, 6
    %vm2401 = vcmask 1042434
    %v2402 = vsel %vm2401, %v2400, %v2399
    %vm2403 = vcmask 1046534
    %v2404 = vsel %vm2403, %v2400, %v2402
    %v2405 = vrot.slane %v2394, 5
    %vm2406 = vcmask 1043459
    %v2407 = vsel %vm2406, %v2405, %v2404
    %vm2408 = vcmask 1047559
    %v2409 = vsel %vm2408, %v2405, %v2407
    %v2410 = vrot.slane %v2372, 7
    %v2411 = vsel %vm2396, %v2410, %v2369
    %v2412 = vsel %vm2398, %v2410, %v2411
    %v2413 = vrot.slane %v2375, 6
    %v2414 = vsel %vm2401, %v2413, %v2412
    %v2415 = vsel %vm2403, %v2413, %v2414
    %v2416 = vrot.slane %v2378, 5
    %v2417 = vsel %vm2406, %v2416, %v2415
    %v2418 = vsel %vm2408, %v2416, %v2417
    %2421 = vst [vmem:[#allocation8] sm:$0xff] %v2409
    %2422 = vst [vmem:[#allocation8 + $0x8] sm:$0xf] %v2418
    // Predicated region
    $region30: #{tpu_custom_call.1} parent=1 // pred_check
      _
    $region31: #{tpu_custom_call.1} parent=1 // pred_check_branch
      %2424 = sbr.rel (0) target = $region33
    $region32: #{tpu_custom_call.1} parent=1 // pred_region
      %s2426 = ssub.s32 192, 192
      %2427 = vsyncadd [#allocation4], %s2426
      %s2429 = sshll.u32 [#allocation8], 4
      %s2430 = int_to_ptr.vmem [resolvable:$true] %s2429
      %2432 = dma.vmem_to_hbm [thread:$0]  %s2430, 192, %s4, [#allocation4]
    $region33: #{tpu_custom_call.1} parent=1 // pred_fallthru
      _
    // Predicated region
    $region34: #{tpu_custom_call.1} parent=1 // pred_check
      _
    $region35: #{tpu_custom_call.1} parent=1 // pred_check_branch
      %2434 = sbr.rel (0) target = $region37
    $region36: #{tpu_custom_call.1} parent=1 // pred_region
      %2435 = dma.done [#allocation4], 192
    $region37: #{tpu_custom_call.1} parent=1 // pred_fallthru
      _
    %2436 = vsyncpa [#allocation3], 1
    %2437 = vsyncpa [#allocation6], 1
    %2438 = vsyncpa [#allocation4], 1

</llo_original>
